<compile_context>
chip_gen: v7x
topology: tpu7x:2x2x1
jax: 0.10.0
libtpu: 0.0.40
codegen_flags: <defaults>
</compile_context>

<pallas_src>
import functools

import jax
import jax.numpy as jnp
from jax import lax
from jax.experimental import pallas as pl
from jax.experimental.pallas import tpu as pltpu


# ------------------- Fused MHA kernel (one batch element per grid step) -------------------
def _mha_fused_kernel(x_ref, wqkv_ref, bqkv_ref, wp_t_ref, bp_ref, o_ref, cat_ref,
                      *, num_heads, n_valid):
    # x_ref:    (1, Np, E)  bf16   (Np = N padded to a multiple of 128; padded rows are 0)
    # wqkv_ref: (E, 3E)     bf16   fused per-head Q/K/V weights (Q columns pre-scaled)
    # bqkv_ref: (1, 3E)     f32    fused Q/K/V bias (Q part pre-scaled)
    # wp_t_ref: (E, E)      bf16   projection weight, pre-transposed (x @ wp_t == x @ wp.T)
    # bp_ref:   (1, E)      f32
    # o_ref:    (1, Np, E)  f32
    # cat_ref:  (Np, E)     bf16   VMEM scratch: concatenated head outputs
    x = x_ref[0]                                  # (Np, E) bf16
    Np, E = x.shape
    Hd = E // num_heads

    # One lane-dense K=E matmul for all heads' Q/K/V (f32 accumulate), bias in f32.
    qkv = jnp.dot(x, wqkv_ref[...], preferred_element_type=jnp.float32) + bqkv_ref[...]
    qkv_bf = qkv.astype(jnp.bfloat16)             # (Np, 3E)

    # Key-padding mask bias (only materialized if we actually padded).
    if n_valid < Np:
        key_ids = lax.broadcasted_iota(jnp.int32, (1, Np), 1)
        mask_bias = jnp.where(key_ids < n_valid, 0.0, -1e30).astype(jnp.float32)
    else:
        mask_bias = None

    # Per-head attention; H is small & static. Each head writes its (Np, Hd) output into
    # the bf16 scratch slab -> live ranges stay bounded, no concatenate / lane shuffle.
    for h in range(num_heads):
        lo = h * Hd
        q_h = qkv_bf[:, lo:lo + Hd]                       # (Np, Hd) bf16 (already scaled)
        k_h = qkv_bf[:, E + lo:E + lo + Hd]               # (Np, Hd) bf16
        v_h = qkv_bf[:, 2 * E + lo:2 * E + lo + Hd]       # (Np, Hd) bf16

        # Contract last dims directly (no in-kernel transpose of k); f32 scores.
        s = lax.dot_general(q_h, k_h, (((1,), (1,)), ((), ())),
                            preferred_element_type=jnp.float32)        # (Np, Np) f32
        if mask_bias is not None:
            s = s + mask_bias                                           # mask padded keys

        # Softmax in f32 (v5e-safe); denominator via EUP approximate reciprocal.
        s = s - jnp.max(s, axis=-1, keepdims=True)
        p = jnp.exp(s)
        inv = pl.reciprocal(jnp.sum(p, axis=-1, keepdims=True), approx=True)
        attn = (p * inv).astype(jnp.bfloat16)
        # attn_dropout(p=0) == identity.

        out_h = jnp.dot(attn, v_h, preferred_element_type=jnp.float32)  # (Np, Hd) f32
        cat_ref[:, lo:lo + Hd] = out_h.astype(jnp.bfloat16)

    # Fused output projection: single full-K (=E) bf16 matmul, f32 accumulate.
    # proj_drop(p=0) == identity.
    o_ref[0] = (jnp.dot(cat_ref[...], wp_t_ref[...],
                        preferred_element_type=jnp.float32) + bp_ref[...])


# ----------------------------------- Wrapper -----------------------------------
@functools.partial(jax.jit, static_argnames=("num_heads",))
def multi_headed_attention(x, params, *, num_heads):
    B, N, E = x.shape
    scale = float(E) ** (-0.5)                    # embed_dim scaling, per the module

    # ---- one-time parameter fusion / pre-transpose / pre-scale (outside the kernel) ----
    def _fuse(w):                                 # per-head (H, E, Hd) -> (E, H*Hd)
        return jnp.transpose(w, (1, 0, 2)).reshape(E, E)

    wq = _fuse(params["wq"]) * scale              # fold E**-0.5 into Q weight
    wk = _fuse(params["wk"])
    wv = _fuse(params["wv"])
    wqkv = jnp.concatenate([wq, wk, wv], axis=1).astype(jnp.bfloat16)      # (E, 3E) bf16

    bq = params["bq"].reshape(1, E) * scale       # fold E**-0.5 into Q bias
    bk = params["bk"].reshape(1, E)
    bv = params["bv"].reshape(1, E)
    bqkv = jnp.concatenate([bq, bk, bv], axis=1).astype(jnp.float32)       # (1, 3E) f32

    wp_t = params["wp"].T.astype(jnp.bfloat16)    # PyTorch (out,in) -> pre-T for x @ wp_t
    bp = params["bp"].astype(jnp.float32)         # (1, E)

    # Pad the patch axis to a multiple of 128 for lane-dense score / output tiles.
    N_pad = ((N + 127) // 128) * 128
    x_p = x if N_pad == N else jnp.pad(x, ((0, 0), (0, N_pad - N), (0, 0)))
    x_p = x_p.astype(jnp.bfloat16)

    kernel = functools.partial(_mha_fused_kernel, num_heads=num_heads, n_valid=N)

    out = pl.pallas_call(
        kernel,
        out_shape=jax.ShapeDtypeStruct((B, N_pad, E), jnp.float32),
        grid_spec=pltpu.PrefetchScalarGridSpec(
            num_scalar_prefetch=0,
            grid=(B,),
            in_specs=[
                # x: the only array re-fetched per grid step (double-buffered by default).
                pl.BlockSpec((1, N_pad, E), lambda b: (b, 0, 0)),
                # Constant-index weights/biases: single-buffered (resident, no dead buffer).
                pl.BlockSpec((E, 3 * E), lambda b: (0, 0), pipeline_mode=pl.Buffered(1)),
                pl.BlockSpec((1, 3 * E), lambda b: (0, 0), pipeline_mode=pl.Buffered(1)),
                pl.BlockSpec((E, E), lambda b: (0, 0), pipeline_mode=pl.Buffered(1)),
                pl.BlockSpec((1, E), lambda b: (0, 0), pipeline_mode=pl.Buffered(1)),
            ],
            out_specs=pl.BlockSpec((1, N_pad, E), lambda b: (b, 0, 0)),
            scratch_shapes=[pltpu.VMEM((N_pad, E), jnp.bfloat16)],   # concat slab
        ),
        compiler_params=pltpu.CompilerParams(
            dimension_semantics=("parallel",),        # shard batch across TensorCores
            vmem_limit_bytes=32 * 1024 * 1024,        # raise v5e's 16 MiB scoped default
        ),
    )(x_p, wqkv, bqkv, wp_t, bp)

    return out if N_pad == N else out[:, :N, :]


# ---------------- Pure-JAX reference (silent correctness check, f32) ----------------
def _reference(x, params, num_heads):
    B, N, E = x.shape
    outs = []
    for h in range(num_heads):
        q = x @ params["wq"][h] + params["bq"][h]
        k = x @ params["wk"][h] + params["bk"][h]
        v = x @ params["wv"][h] + params["bv"][h]
        s = jnp.einsum("bnd,bmd->bnm", q, k) * (E ** -0.5)
        attn = jax.nn.softmax(s, axis=-1)
        outs.append(jnp.einsum("bnm,bmd->bnd", attn, v))
    cat = jnp.concatenate(outs, axis=-1)
    return cat @ params["wp"].T + params["bp"][0]


if __name__ == "__main__":
    # Small, module-consistent shapes.
    B, N, E, H = 2, 8, 32, 4      # batch, num_patches, embed_dim, num_heads
    Hd = E // H

    key = jax.random.PRNGKey(0)
    keys = jax.random.split(key, 9)

    x = jax.random.normal(keys[0], (B, N, E), dtype=jnp.float32)

    # nn.Linear(E, Hd) has weight (Hd, E); we store the transposed (E, Hd) per-head form so
    # the kernel computes x @ W directly (equivalent to x @ weight.T in PyTorch).
    params = {
        "wq": jax.random.normal(keys[1], (H, E, Hd), dtype=jnp.float32) * 0.02,
        "wk": jax.random.normal(keys[2], (H, E, Hd), dtype=jnp.float32) * 0.02,
        "wv": jax.random.normal(keys[3], (H, E, Hd), dtype=jnp.float32) * 0.02,
        "bq": jax.random.normal(keys[4], (H, 1, Hd), dtype=jnp.float32) * 0.02,
        "bk": jax.random.normal(keys[5], (H, 1, Hd), dtype=jnp.float32) * 0.02,
        "bv": jax.random.normal(keys[6], (H, 1, Hd), dtype=jnp.float32) * 0.02,
        "wp": jax.random.normal(keys[7], (E, E), dtype=jnp.float32) * 0.02,   # PyTorch (out,in)
        "bp": jax.random.normal(keys[8], (1, E), dtype=jnp.float32) * 0.02,
    }

    out = multi_headed_attention(x, params, num_heads=H)
    out = jax.block_until_ready(out)

    ref = _reference(x, params, H)
    assert out.shape == (B, N, E)
    # Tolerance accounts for bf16 MXU operands (f32 accumulation) and the EUP approximate
    # reciprocal in the softmax denominator.
    assert jnp.allclose(out, ref, atol=5e-3, rtol=5e-2), "Pallas output mismatch vs reference"

    print("KERNEL_OK")
</pallas_src>

<mosaic_0001>
module attributes {stable_mosaic.version = 11 : i64} {
  func.func @_mha_fused_kernel(%arg0: i32, %arg1: memref<1x128x32xbf16, #tpu.memory_space<vmem>>, %arg2: memref<32x96xbf16, #tpu.memory_space<vmem>>, %arg3: memref<1x96xf32, #tpu.memory_space<vmem>>, %arg4: memref<32x32xbf16, #tpu.memory_space<vmem>>, %arg5: memref<1x32xf32, #tpu.memory_space<vmem>>, %arg6: memref<1x128x32xf32, #tpu.memory_space<vmem>>, %arg7: memref<128x32xbf16, #tpu.memory_space<vmem>>) attributes {dimension_semantics = [#tpu.dimension_semantics<parallel>], iteration_bounds = array<i64: 2>, scalar_prefetch = 0 : i64, scratch_operands = 1 : i64, tpu.core_type = #tpu.core_type<tc>, window_params = [{transform_indices = @transform_0, window_bounds = array<i64: 1, 128, 32>}, {pipeline_mode = #tpu.pipeline_mode<synchronous>, transform_indices = @transform_1, window_bounds = array<i64: 32, 96>}, {pipeline_mode = #tpu.pipeline_mode<synchronous>, transform_indices = @transform_2, window_bounds = array<i64: 1, 96>}, {pipeline_mode = #tpu.pipeline_mode<synchronous>, transform_indices = @transform_3, window_bounds = array<i64: 32, 32>}, {pipeline_mode = #tpu.pipeline_mode<synchronous>, transform_indices = @transform_4, window_bounds = array<i64: 1, 32>}, {transform_indices = @transform_5, window_bounds = array<i64: 1, 128, 32>}]} {
    %c0 = arith.constant 0 : index
    %c0_0 = arith.constant 0 : index
    %c0_1 = arith.constant 0 : index
    %0 = vector.load %arg1[%c0, %c0_0, %c0_1] : memref<1x128x32xbf16, #tpu.memory_space<vmem>>, vector<1x128x32xbf16>
    %1 = vector.shape_cast %0 : vector<1x128x32xbf16> to vector<128x32xbf16>
    %c0_2 = arith.constant 0 : index
    %c0_3 = arith.constant 0 : index
    %2 = vector.load %arg2[%c0_2, %c0_3] : memref<32x96xbf16, #tpu.memory_space<vmem>>, vector<32x96xbf16>
    %cst = arith.constant dense<0.000000e+00> : vector<128x96xf32>
    %3 = tpu.matmul %1, %2, %cst {dimension_numbers = #tpu.dot_dimension_numbers<[1], [0], [0], [1], [0, 0, 1, 1], [], []>} : vector<128x32xbf16>, vector<32x96xbf16>, vector<128x96xf32> -> vector<128x96xf32>
    %c0_4 = arith.constant 0 : index
    %c0_5 = arith.constant 0 : index
    %4 = vector.load %arg3[%c0_4, %c0_5] : memref<1x96xf32, #tpu.memory_space<vmem>>, vector<1x96xf32>
    %5 = vector.broadcast %4 : vector<1x96xf32> to vector<128x96xf32>
    %6 = arith.addf %3, %5 : vector<128x96xf32>
    %7 = arith.truncf %6 : vector<128x96xf32> to vector<128x96xbf16>
    %8 = tpu.iota {dimensions = array<i32: 1>} : vector<1x128xi32>
    %c8_i32 = arith.constant 8 : i32
    %9 = vector.broadcast %c8_i32 : i32 to vector<1x128xi32>
    %10 = arith.cmpi slt, %8, %9 : vector<1x128xi32>
    %cst_6 = arith.constant 0.000000e+00 : f32
    %cst_7 = arith.constant -1.000000e+30 : f32
    %11 = vector.broadcast %cst_6 : f32 to vector<1x128xf32>
    %12 = vector.broadcast %cst_7 : f32 to vector<1x128xf32>
    %13 = arith.select %10, %11, %12 : vector<1x128xi1>, vector<1x128xf32>
    %14 = vector.extract_strided_slice %7 {offsets = [0, 0], sizes = [128, 8], strides = [1, 1]} : vector<128x96xbf16> to vector<128x8xbf16>
    %15 = vector.extract_strided_slice %7 {offsets = [0, 32], sizes = [128, 8], strides = [1, 1]} : vector<128x96xbf16> to vector<128x8xbf16>
    %16 = vector.extract_strided_slice %7 {offsets = [0, 64], sizes = [128, 8], strides = [1, 1]} : vector<128x96xbf16> to vector<128x8xbf16>
    %cst_8 = arith.constant dense<0.000000e+00> : vector<128x128xf32>
    %17 = tpu.matmul %14, %15, %cst_8 {dimension_numbers = #tpu.dot_dimension_numbers<[1], [1], [0], [0], [0, 0, 1, 0], [], []>} : vector<128x8xbf16>, vector<128x8xbf16>, vector<128x128xf32> -> vector<128x128xf32>
    %18 = vector.broadcast %13 : vector<1x128xf32> to vector<128x128xf32>
    %19 = arith.addf %17, %18 : vector<128x128xf32>
    %cst_9 = arith.constant dense<0xFF800000> : vector<128xf32>
    %20 = vector.multi_reduction <maximumf>, %19, %cst_9 [1] : vector<128x128xf32> to vector<128xf32>
    %21 = vector.shape_cast %20 : vector<128xf32> to vector<128x1xf32>
    %22 = vector.broadcast %21 : vector<128x1xf32> to vector<128x128xf32>
    %23 = arith.subf %19, %22 : vector<128x128xf32>
    %24 = math.exp %23 : vector<128x128xf32>
    %cst_10 = arith.constant dense<0.000000e+00> : vector<128xf32>
    %25 = vector.multi_reduction <add>, %24, %cst_10 [1] : vector<128x128xf32> to vector<128xf32>
    %26 = vector.shape_cast %25 : vector<128xf32> to vector<128x1xf32>
    %27 = tpu.reciprocal %26 {approx = true} : vector<128x1xf32> -> vector<128x1xf32>
    %28 = vector.broadcast %27 : vector<128x1xf32> to vector<128x128xf32>
    %29 = arith.mulf %24, %28 : vector<128x128xf32>
    %30 = arith.truncf %29 : vector<128x128xf32> to vector<128x128xbf16>
    %cst_11 = arith.constant dense<0.000000e+00> : vector<128x8xf32>
    %31 = tpu.matmul %30, %16, %cst_11 {dimension_numbers = #tpu.dot_dimension_numbers<[1], [0], [0], [1], [0, 0, 1, 1], [], []>} : vector<128x128xbf16>, vector<128x8xbf16>, vector<128x8xf32> -> vector<128x8xf32>
    %32 = arith.truncf %31 : vector<128x8xf32> to vector<128x8xbf16>
    %c0_12 = arith.constant 0 : index
    %c0_13 = arith.constant 0 : index
    %33 = vector.load %arg7[%c0_12, %c0_13] : memref<128x32xbf16, #tpu.memory_space<vmem>>, vector<128x8xbf16>
    tpu.vector_store %arg7[%c0_12, %c0_13], %32 {strides = array<i32>} : memref<128x32xbf16, #tpu.memory_space<vmem>>, vector<128x8xbf16>,
    %34 = vector.extract_strided_slice %7 {offsets = [0, 8], sizes = [128, 8], strides = [1, 1]} : vector<128x96xbf16> to vector<128x8xbf16>
    %35 = vector.extract_strided_slice %7 {offsets = [0, 40], sizes = [128, 8], strides = [1, 1]} : vector<128x96xbf16> to vector<128x8xbf16>
    %36 = vector.extract_strided_slice %7 {offsets = [0, 72], sizes = [128, 8], strides = [1, 1]} : vector<128x96xbf16> to vector<128x8xbf16>
    %cst_14 = arith.constant dense<0.000000e+00> : vector<128x128xf32>
    %37 = tpu.matmul %34, %35, %cst_14 {dimension_numbers = #tpu.dot_dimension_numbers<[1], [1], [0], [0], [0, 0, 1, 0], [], []>} : vector<128x8xbf16>, vector<128x8xbf16>, vector<128x128xf32> -> vector<128x128xf32>
    %38 = vector.broadcast %13 : vector<1x128xf32> to vector<128x128xf32>
    %39 = arith.addf %37, %38 : vector<128x128xf32>
    %cst_15 = arith.constant dense<0xFF800000> : vector<128xf32>
    %40 = vector.multi_reduction <maximumf>, %39, %cst_15 [1] : vector<128x128xf32> to vector<128xf32>
    %41 = vector.shape_cast %40 : vector<128xf32> to vector<128x1xf32>
    %42 = vector.broadcast %41 : vector<128x1xf32> to vector<128x128xf32>
    %43 = arith.subf %39, %42 : vector<128x128xf32>
    %44 = math.exp %43 : vector<128x128xf32>
    %cst_16 = arith.constant dense<0.000000e+00> : vector<128xf32>
    %45 = vector.multi_reduction <add>, %44, %cst_16 [1] : vector<128x128xf32> to vector<128xf32>
    %46 = vector.shape_cast %45 : vector<128xf32> to vector<128x1xf32>
    %47 = tpu.reciprocal %46 {approx = true} : vector<128x1xf32> -> vector<128x1xf32>
    %48 = vector.broadcast %47 : vector<128x1xf32> to vector<128x128xf32>
    %49 = arith.mulf %44, %48 : vector<128x128xf32>
    %50 = arith.truncf %49 : vector<128x128xf32> to vector<128x128xbf16>
    %cst_17 = arith.constant dense<0.000000e+00> : vector<128x8xf32>
    %51 = tpu.matmul %50, %36, %cst_17 {dimension_numbers = #tpu.dot_dimension_numbers<[1], [0], [0], [1], [0, 0, 1, 1], [], []>} : vector<128x128xbf16>, vector<128x8xbf16>, vector<128x8xf32> -> vector<128x8xf32>
    %52 = arith.truncf %51 : vector<128x8xf32> to vector<128x8xbf16>
    %c0_18 = arith.constant 0 : index
    %c8 = arith.constant 8 : index
    %53 = vector.load %arg7[%c0_18, %c8] : memref<128x32xbf16, #tpu.memory_space<vmem>>, vector<128x8xbf16>
    tpu.vector_store %arg7[%c0_18, %c8], %52 {strides = array<i32>} : memref<128x32xbf16, #tpu.memory_space<vmem>>, vector<128x8xbf16>,
    %54 = vector.extract_strided_slice %7 {offsets = [0, 16], sizes = [128, 8], strides = [1, 1]} : vector<128x96xbf16> to vector<128x8xbf16>
    %55 = vector.extract_strided_slice %7 {offsets = [0, 48], sizes = [128, 8], strides = [1, 1]} : vector<128x96xbf16> to vector<128x8xbf16>
    %56 = vector.extract_strided_slice %7 {offsets = [0, 80], sizes = [128, 8], strides = [1, 1]} : vector<128x96xbf16> to vector<128x8xbf16>
    %cst_19 = arith.constant dense<0.000000e+00> : vector<128x128xf32>
    %57 = tpu.matmul %54, %55, %cst_19 {dimension_numbers = #tpu.dot_dimension_numbers<[1], [1], [0], [0], [0, 0, 1, 0], [], []>} : vector<128x8xbf16>, vector<128x8xbf16>, vector<128x128xf32> -> vector<128x128xf32>
    %58 = vector.broadcast %13 : vector<1x128xf32> to vector<128x128xf32>
    %59 = arith.addf %57, %58 : vector<128x128xf32>
    %cst_20 = arith.constant dense<0xFF800000> : vector<128xf32>
    %60 = vector.multi_reduction <maximumf>, %59, %cst_20 [1] : vector<128x128xf32> to vector<128xf32>
    %61 = vector.shape_cast %60 : vector<128xf32> to vector<128x1xf32>
    %62 = vector.broadcast %61 : vector<128x1xf32> to vector<128x128xf32>
    %63 = arith.subf %59, %62 : vector<128x128xf32>
    %64 = math.exp %63 : vector<128x128xf32>
    %cst_21 = arith.constant dense<0.000000e+00> : vector<128xf32>
    %65 = vector.multi_reduction <add>, %64, %cst_21 [1] : vector<128x128xf32> to vector<128xf32>
    %66 = vector.shape_cast %65 : vector<128xf32> to vector<128x1xf32>
    %67 = tpu.reciprocal %66 {approx = true} : vector<128x1xf32> -> vector<128x1xf32>
    %68 = vector.broadcast %67 : vector<128x1xf32> to vector<128x128xf32>
    %69 = arith.mulf %64, %68 : vector<128x128xf32>
    %70 = arith.truncf %69 : vector<128x128xf32> to vector<128x128xbf16>
    %cst_22 = arith.constant dense<0.000000e+00> : vector<128x8xf32>
    %71 = tpu.matmul %70, %56, %cst_22 {dimension_numbers = #tpu.dot_dimension_numbers<[1], [0], [0], [1], [0, 0, 1, 1], [], []>} : vector<128x128xbf16>, vector<128x8xbf16>, vector<128x8xf32> -> vector<128x8xf32>
    %72 = arith.truncf %71 : vector<128x8xf32> to vector<128x8xbf16>
    %c0_23 = arith.constant 0 : index
    %c16 = arith.constant 16 : index
    %73 = vector.load %arg7[%c0_23, %c16] : memref<128x32xbf16, #tpu.memory_space<vmem>>, vector<128x8xbf16>
    tpu.vector_store %arg7[%c0_23, %c16], %72 {strides = array<i32>} : memref<128x32xbf16, #tpu.memory_space<vmem>>, vector<128x8xbf16>,
    %74 = vector.extract_strided_slice %7 {offsets = [0, 24], sizes = [128, 8], strides = [1, 1]} : vector<128x96xbf16> to vector<128x8xbf16>
    %75 = vector.extract_strided_slice %7 {offsets = [0, 56], sizes = [128, 8], strides = [1, 1]} : vector<128x96xbf16> to vector<128x8xbf16>
    %76 = vector.extract_strided_slice %7 {offsets = [0, 88], sizes = [128, 8], strides = [1, 1]} : vector<128x96xbf16> to vector<128x8xbf16>
    %cst_24 = arith.constant dense<0.000000e+00> : vector<128x128xf32>
    %77 = tpu.matmul %74, %75, %cst_24 {dimension_numbers = #tpu.dot_dimension_numbers<[1], [1], [0], [0], [0, 0, 1, 0], [], []>} : vector<128x8xbf16>, vector<128x8xbf16>, vector<128x128xf32> -> vector<128x128xf32>
    %78 = vector.broadcast %13 : vector<1x128xf32> to vector<128x128xf32>
    %79 = arith.addf %77, %78 : vector<128x128xf32>
    %cst_25 = arith.constant dense<0xFF800000> : vector<128xf32>
    %80 = vector.multi_reduction <maximumf>, %79, %cst_25 [1] : vector<128x128xf32> to vector<128xf32>
    %81 = vector.shape_cast %80 : vector<128xf32> to vector<128x1xf32>
    %82 = vector.broadcast %81 : vector<128x1xf32> to vector<128x128xf32>
    %83 = arith.subf %79, %82 : vector<128x128xf32>
    %84 = math.exp %83 : vector<128x128xf32>
    %cst_26 = arith.constant dense<0.000000e+00> : vector<128xf32>
    %85 = vector.multi_reduction <add>, %84, %cst_26 [1] : vector<128x128xf32> to vector<128xf32>
    %86 = vector.shape_cast %85 : vector<128xf32> to vector<128x1xf32>
    %87 = tpu.reciprocal %86 {approx = true} : vector<128x1xf32> -> vector<128x1xf32>
    %88 = vector.broadcast %87 : vector<128x1xf32> to vector<128x128xf32>
    %89 = arith.mulf %84, %88 : vector<128x128xf32>
    %90 = arith.truncf %89 : vector<128x128xf32> to vector<128x128xbf16>
    %cst_27 = arith.constant dense<0.000000e+00> : vector<128x8xf32>
    %91 = tpu.matmul %90, %76, %cst_27 {dimension_numbers = #tpu.dot_dimension_numbers<[1], [0], [0], [1], [0, 0, 1, 1], [], []>} : vector<128x128xbf16>, vector<128x8xbf16>, vector<128x8xf32> -> vector<128x8xf32>
    %92 = arith.truncf %91 : vector<128x8xf32> to vector<128x8xbf16>
    %c0_28 = arith.constant 0 : index
    %c24 = arith.constant 24 : index
    %93 = vector.load %arg7[%c0_28, %c24] : memref<128x32xbf16, #tpu.memory_space<vmem>>, vector<128x8xbf16>
    tpu.vector_store %arg7[%c0_28, %c24], %92 {strides = array<i32>} : memref<128x32xbf16, #tpu.memory_space<vmem>>, vector<128x8xbf16>,
    %c0_29 = arith.constant 0 : index
    %c0_30 = arith.constant 0 : index
    %94 = vector.load %arg7[%c0_29, %c0_30] : memref<128x32xbf16, #tpu.memory_space<vmem>>, vector<128x32xbf16>
    %c0_31 = arith.constant 0 : index
    %c0_32 = arith.constant 0 : index
    %95 = vector.load %arg4[%c0_31, %c0_32] : memref<32x32xbf16, #tpu.memory_space<vmem>>, vector<32x32xbf16>
    %cst_33 = arith.constant dense<0.000000e+00> : vector<128x32xf32>
    %96 = tpu.matmul %94, %95, %cst_33 {dimension_numbers = #tpu.dot_dimension_numbers<[1], [0], [0], [1], [0, 0, 1, 1], [], []>} : vector<128x32xbf16>, vector<32x32xbf16>, vector<128x32xf32> -> vector<128x32xf32>
    %c0_34 = arith.constant 0 : index
    %c0_35 = arith.constant 0 : index
    %97 = vector.load %arg5[%c0_34, %c0_35] : memref<1x32xf32, #tpu.memory_space<vmem>>, vector<1x32xf32>
    %98 = vector.broadcast %97 : vector<1x32xf32> to vector<128x32xf32>
    %99 = arith.addf %96, %98 : vector<128x32xf32>
    %c0_36 = arith.constant 0 : index
    %c0_37 = arith.constant 0 : index
    %c0_38 = arith.constant 0 : index
    %100 = vector.load %arg6[%c0_36, %c0_37, %c0_38] : memref<1x128x32xf32, #tpu.memory_space<vmem>>, vector<1x128x32xf32>
    %101 = vector.shape_cast %100 : vector<1x128x32xf32> to vector<128x32xf32>
    %102 = vector.shape_cast %99 : vector<128x32xf32> to vector<1x128x32xf32>
    tpu.vector_store %arg6[%c0_36, %c0_37, %c0_38], %102 {strides = array<i32>} : memref<1x128x32xf32, #tpu.memory_space<vmem>>, vector<1x128x32xf32>,
    return
  }
  func.func @transform_0(%arg0: i32) -> (i32, i32, i32) {
    %c0_i32 = arith.constant 0 : i32
    %c0_i32_0 = arith.constant 0 : i32
    %c0_i32_1 = arith.constant 0 : i32
    return %arg0, %c0_i32, %c0_i32_0 : i32, i32, i32
  }
  func.func @transform_1(%arg0: i32) -> (i32, i32) {
    %c0_i32 = arith.constant 0 : i32
    %c0_i32_0 = arith.constant 0 : i32
    %c0_i32_1 = arith.constant 0 : i32
    return %c0_i32, %c0_i32_0 : i32, i32
  }
  func.func @transform_2(%arg0: i32) -> (i32, i32) {
    %c0_i32 = arith.constant 0 : i32
    %c0_i32_0 = arith.constant 0 : i32
    %c0_i32_1 = arith.constant 0 : i32
    return %c0_i32, %c0_i32_0 : i32, i32
  }
  func.func @transform_3(%arg0: i32) -> (i32, i32) {
    %c0_i32 = arith.constant 0 : i32
    %c0_i32_0 = arith.constant 0 : i32
    %c0_i32_1 = arith.constant 0 : i32
    return %c0_i32, %c0_i32_0 : i32, i32
  }
  func.func @transform_4(%arg0: i32) -> (i32, i32) {
    %c0_i32 = arith.constant 0 : i32
    %c0_i32_0 = arith.constant 0 : i32
    %c0_i32_1 = arith.constant 0 : i32
    return %c0_i32, %c0_i32_0 : i32, i32
  }
  func.func @transform_5(%arg0: i32) -> (i32, i32, i32) {
    %c0_i32 = arith.constant 0 : i32
    %c0_i32_0 = arith.constant 0 : i32
    %c0_i32_1 = arith.constant 0 : i32
    return %arg0, %c0_i32, %c0_i32_0 : i32, i32, i32
  }
}

</mosaic_0001>

<llo_original>
// kernel: multi_headed_attention.1
$region0: #{multi_headed_attention.1}
  #allocation0 [shape = 'u32[]', space=smem, size = 0x4, offset = 0x4, fixed_abs, tag = 'smem constant byte address 0x4 - core index']
  #allocation1 [shape = 'u32[144,128]{1,0:T(1,128)}', space=vmem, size = 0x12000, scoped, tag = 'internal scratch']
  #allocation2 [shape = 'bf16[128,32]{1,0:T(16,128)(2,1)}', space=vmem, size = 0x8000, scoped, tag = 'scratch operand']
  %s0 = inlined_call_operand.vmem [shape: bf16[2,128,32], index: 0, kind: input, shape index: {}]
  %s1 = inlined_call_operand.vmem [shape: bf16[32,96], index: 1, kind: input, shape index: {}]
  %s2 = inlined_call_operand.vmem [shape: f32[1,96], index: 2, kind: input, shape index: {}]
  %s3 = inlined_call_operand.vmem [shape: bf16[32,32], index: 3, kind: input, shape index: {}]
  %s4 = inlined_call_operand.vmem [shape: f32[1,32], index: 4, kind: input, shape index: {}]
  %s5 = inlined_call_operand.vmem [shape: f32[2,128,32], index: 5, kind: output, shape index: {}]
  %s6 = sld [smem:[#allocation0]]
  $region53: #{multi_headed_attention.1} parent=0
    _
  %s8 = ssub.s32 1, %s6
  %s9 = scalar_select 0, %s8, %s6
  loop: start=0, step=1, limit=4
  $region2: #{multi_headed_attention.1} parent=0 // loop_pre_header
    _
  $region3: #{multi_headed_attention.1} parent=0 // loop_header
    %s11 = sphi 0, %s15
    %p12 = scmp.ge.s32.totalorder %s11, 4
    %s21 = sphi 0, %s23
    %s24 = sphi 0, %s21
    %s25 = sphi 0, %s24
    %s41 = sphi 0, %s25
    %s45 = sphi 0, %s45
    %s47 = sphi 0, %s45
    %s48 = sphi 0, %s47
    %s62 = sphi 0, %s48
    %s66 = sphi 0, %s66
    %s68 = sphi 0, %s66
    %s69 = sphi 0, %s68
    %s83 = sphi 0, %s69
    %s87 = sphi 0, %s87
    %s89 = sphi 0, %s87
    %s90 = sphi 0, %s89
    %s104 = sphi 0, %s90
    %s108 = sphi 0, %s108
    %s110 = sphi 0, %s108
    %s111 = sphi 0, %s110
    %s125 = sphi 0, %s111
    %s131 = sphi 0, %s133
    %s134 = sphi 0, %s131
    %s135 = sphi 0, %s134
    %s151 = sphi 0, %s135
  $region4: #{multi_headed_attention.1} parent=0 // loop_header_branch
    %14 = sbr.rel (%p12) target = $region8
  $region5: #{multi_headed_attention.1} parent=0 // loop_body
    %s16 = ssub.s32 %s11, 1
    %s17 = ssub.s32 %s11, 2
    %s18 = sadd.s32 %s11, 1
    %s19 = ssub.s32 %s11, %s18
    %p20 = scmp.eq.s32.totalorder %s19, 0
    %s22 = sadd.s32 %s21, 1
    %s23 = scalar_select %p20, %s21, %s22
    %p26 = pneg %p20
    %p27 = scmp.eq.s32.totalorder %s11, 1
    %p28 = por %p26, %p27
    %p29 = scmp.ne.s32.totalorder %s21, %s24
    %p30 = scmp.eq.s32.totalorder %s11, 0
    %p31 = por %p29, %p30
    %p32 = scmp.ne.s32.totalorder %s21, %s24
    %p33 = scmp.eq.s32.totalorder %s16, 1
    %p34 = por %p32, %p33
    %p35 = scmp.ne.s32.totalorder %s24, %s25
    %p36 = scmp.eq.s32.totalorder %s16, 0
    %p37 = por %p35, %p36
    %p38 = scmp.ne.s32.totalorder %s24, %s25
    %p39 = scmp.eq.s32.totalorder %s17, 1
    %p40 = por %p38, %p39
    %p42 = scmp.ne.s32.totalorder %s25, %s41
    %p43 = scmp.eq.s32.totalorder %s17, 0
    %p44 = por %p42, %p43
    %s46 = sadd.s32 %s45, 1
    %p49 = scmp.eq.s32.totalorder %s11, 1
    %p50 = scmp.ne.s32.totalorder %s45, %s47
    %p51 = scmp.eq.s32.totalorder %s11, 0
    %p52 = por %p50, %p51
    %p53 = scmp.ne.s32.totalorder %s45, %s47
    %p54 = scmp.eq.s32.totalorder %s16, 1
    %p55 = por %p53, %p54
    %p56 = scmp.ne.s32.totalorder %s47, %s48
    %p57 = scmp.eq.s32.totalorder %s16, 0
    %p58 = por %p56, %p57
    %p59 = scmp.ne.s32.totalorder %s47, %s48
    %p60 = scmp.eq.s32.totalorder %s17, 1
    %p61 = por %p59, %p60
    %p63 = scmp.ne.s32.totalorder %s48, %s62
    %p64 = scmp.eq.s32.totalorder %s17, 0
    %p65 = por %p63, %p64
    %s67 = sadd.s32 %s66, 1
    %p70 = scmp.eq.s32.totalorder %s11, 1
    %p71 = scmp.ne.s32.totalorder %s66, %s68
    %p72 = scmp.eq.s32.totalorder %s11, 0
    %p73 = por %p71, %p72
    %p74 = scmp.ne.s32.totalorder %s66, %s68
    %p75 = scmp.eq.s32.totalorder %s16, 1
    %p76 = por %p74, %p75
    %p77 = scmp.ne.s32.totalorder %s68, %s69
    %p78 = scmp.eq.s32.totalorder %s16, 0
    %p79 = por %p77, %p78
    %p80 = scmp.ne.s32.totalorder %s68, %s69
    %p81 = scmp.eq.s32.totalorder %s17, 1
    %p82 = por %p80, %p81
    %p84 = scmp.ne.s32.totalorder %s69, %s83
    %p85 = scmp.eq.s32.totalorder %s17, 0
    %p86 = por %p84, %p85
    %s88 = sadd.s32 %s87, 1
    %p91 = scmp.eq.s32.totalorder %s11, 1
    %p92 = scmp.ne.s32.totalorder %s87, %s89
    %p93 = scmp.eq.s32.totalorder %s11, 0
    %p94 = por %p92, %p93
    %p95 = scmp.ne.s32.totalorder %s87, %s89
    %p96 = scmp.eq.s32.totalorder %s16, 1
    %p97 = por %p95, %p96
    %p98 = scmp.ne.s32.totalorder %s89, %s90
    %p99 = scmp.eq.s32.totalorder %s16, 0
    %p100 = por %p98, %p99
    %p101 = scmp.ne.s32.totalorder %s89, %s90
    %p102 = scmp.eq.s32.totalorder %s17, 1
    %p103 = por %p101, %p102
    %p105 = scmp.ne.s32.totalorder %s90, %s104
    %p106 = scmp.eq.s32.totalorder %s17, 0
    %p107 = por %p105, %p106
    %s109 = sadd.s32 %s108, 1
    %p112 = scmp.eq.s32.totalorder %s11, 1
    %p113 = scmp.ne.s32.totalorder %s108, %s110
    %p114 = scmp.eq.s32.totalorder %s11, 0
    %p115 = por %p113, %p114
    %p116 = scmp.ne.s32.totalorder %s108, %s110
    %p117 = scmp.eq.s32.totalorder %s16, 1
    %p118 = por %p116, %p117
    %p119 = scmp.ne.s32.totalorder %s110, %s111
    %p120 = scmp.eq.s32.totalorder %s16, 0
    %p121 = por %p119, %p120
    %p122 = scmp.ne.s32.totalorder %s110, %s111
    %p123 = scmp.eq.s32.totalorder %s17, 1
    %p124 = por %p122, %p123
    %p126 = scmp.ne.s32.totalorder %s111, %s125
    %p127 = scmp.eq.s32.totalorder %s17, 0
    %p128 = por %p126, %p127
    %s129 = ssub.s32 %s11, %s18
    %p130 = scmp.eq.s32.totalorder %s129, 0
    %s132 = sadd.s32 %s131, 1
    %s133 = scalar_select %p130, %s131, %s132
    %p136 = pneg %p130
    %p137 = scmp.eq.s32.totalorder %s11, 1
    %p138 = por %p136, %p137
    %p139 = scmp.ne.s32.totalorder %s131, %s134
    %p140 = scmp.eq.s32.totalorder %s11, 0
    %p141 = por %p139, %p140
    %p142 = scmp.ne.s32.totalorder %s131, %s134
    %p143 = scmp.eq.s32.totalorder %s16, 1
    %p144 = por %p142, %p143
    %p145 = scmp.ne.s32.totalorder %s134, %s135
    %p146 = scmp.eq.s32.totalorder %s16, 0
    %p147 = por %p145, %p146
    %p148 = scmp.ne.s32.totalorder %s134, %s135
    %p149 = scmp.eq.s32.totalorder %s17, 1
    %p150 = por %p148, %p149
    %p152 = scmp.ne.s32.totalorder %s135, %s151
    %p153 = scmp.eq.s32.totalorder %s17, 0
    %p154 = por %p152, %p153
    %p155 = scmp.le.s32.totalorder 1, %s11
    %p156 = scmp.lt.s32.totalorder %s11, 3
    %p157 = pnand %p155, %p156
    %p158 = pneg %p157
    // Predicated region
    $region9: #{multi_headed_attention.1} parent=5 // pred_check
      _
    $region10: #{multi_headed_attention.1} parent=5 // pred_check_branch
      %160 = sbr.rel (%p157) target = $region12
    $region11: #{multi_headed_attention.1} parent=5 // pred_region
      %s161 = ssub.s32 %s11, 1
      // Predicated region
      $region13: #{multi_headed_attention.1} parent=11 // pred_check
        %p162 = pneg %p58
      $region14: #{multi_headed_attention.1} parent=11 // pred_check_branch
        %164 = sbr.rel (%p162) target = $region16
      $region15: #{multi_headed_attention.1} parent=11 // pred_region
        _
      $region16: #{multi_headed_attention.1} parent=11 // pred_fallthru
        _
      // Predicated region
      $region17: #{multi_headed_attention.1} parent=11 // pred_check
        %p165 = pneg %p79
      $region18: #{multi_headed_attention.1} parent=11 // pred_check_branch
        %167 = sbr.rel (%p165) target = $region20
      $region19: #{multi_headed_attention.1} parent=11 // pred_region
        _
      $region20: #{multi_headed_attention.1} parent=11 // pred_fallthru
        _
      // Predicated region
      $region21: #{multi_headed_attention.1} parent=11 // pred_check
        %p168 = pneg %p100
      $region22: #{multi_headed_attention.1} parent=11 // pred_check_branch
        %170 = sbr.rel (%p168) target = $region24
      $region23: #{multi_headed_attention.1} parent=11 // pred_region
        _
      $region24: #{multi_headed_attention.1} parent=11 // pred_fallthru
        _
      // Predicated region
      $region25: #{multi_headed_attention.1} parent=11 // pred_check
        %p171 = pneg %p121
      $region26: #{multi_headed_attention.1} parent=11 // pred_check_branch
        %173 = sbr.rel (%p171) target = $region28
      $region27: #{multi_headed_attention.1} parent=11 // pred_region
        _
      $region28: #{multi_headed_attention.1} parent=11 // pred_fallthru
        _
    $region12: #{multi_headed_attention.1} parent=5 // pred_fallthru
      _
    %p174 = scmp.lt.s32.totalorder %s11, 2
    // Predicated region
    $region29: #{multi_headed_attention.1} parent=5 // pred_check
      %p175 = pneg %p174
    $region30: #{multi_headed_attention.1} parent=5 // pred_check_branch
      %177 = sbr.rel (%p175) target = $region32
    $region31: #{multi_headed_attention.1} parent=5 // pred_region
      // Predicated region
      $region33: #{multi_headed_attention.1} parent=31 // pred_check
        %p178 = pneg %p31
      $region34: #{multi_headed_attention.1} parent=31 // pred_check_branch
        %180 = sbr.rel (%p178) target = $region36
      $region35: #{multi_headed_attention.1} parent=31 // pred_region
        %p181 = scmp.lt.s32.totalorder %s11, 1
        %s182 = scalar_select %p181, %s11, 1
        %s183 = smul.addr %s182, 16
        %s184 = smul.addr %s183, 4
        %s185 = scalar_lea.vmem %s0, %s184
      $region36: #{multi_headed_attention.1} parent=31 // pred_fallthru
        _
    $region32: #{multi_headed_attention.1} parent=5 // pred_fallthru
      _
    %p186 = scmp.le.s32.totalorder 1, %s11
    %p187 = scmp.lt.s32.totalorder %s11, 3
    %p188 = pnand %p186, %p187
    %p189 = pneg %p188
    // Predicated region
    $region37: #{multi_headed_attention.1} parent=5 // pred_check
      _
    $region38: #{multi_headed_attention.1} parent=5 // pred_check_branch
      %191 = sbr.rel (%p188) target = $region40
    $region39: #{multi_headed_attention.1} parent=5 // pred_region
      %s192 = ssub.s32 %s11, 1
      %p193 = scmp.lt.s32.totalorder %s16, 1
      %s194 = scalar_select %p193, %s16, 1
      %s195 = smul.addr %s194, 16
      %s196 = smul.addr %s195, 4
      %s197 = scalar_lea.vmem %s0, %s196
      %p198 = pneg %p37
      %p199 = pneg %p34
      %p200 = pneg %p58
      %p201 = pneg %p55
      %p202 = pneg %p79
      %p203 = pneg %p76
      %p204 = pneg %p100
      %p205 = pneg %p97
      %p206 = pneg %p121
      %p207 = pneg %p118
      %p208 = pneg %p147
      %p209 = pneg %p144
      %p210 = scmp.lt.s32.totalorder %s16, 1
      %s211 = scalar_select %p210, %s16, 1
      %s212 = smul.addr %s211, 16
      %s213 = smul.addr %s212, 8
      %s214 = scalar_lea.vmem %s5, %s213
      %p215 = scmp.lt.s32.totalorder %s16, 1
      %s216 = scalar_select %p215, %s16, 1
      %s217 = smul.addr %s216, 16
      %s218 = smul.addr %s217, 4
      %s219 = scalar_lea.vmem %s0, %s218
      %p220 = scmp.lt.s32.totalorder %s16, 1
      %s221 = scalar_select %p220, %s16, 1
      %s222 = smul.addr %s221, 16
      %s223 = smul.addr %s222, 8
      %s224 = scalar_lea.vmem %s5, %s223
      %v226 = vld [vmem:[%s219] sm:$0xf]
      %v227 = vld [vmem:[%s219 + $0x4] sm:$0xf]
      %v228 = vld [vmem:[%s219 + $0x8] sm:$0xf]
      %v229 = vld [vmem:[%s219 + $0xc] sm:$0xf]
      %v230 = vld [vmem:[%s219 + $0x10] sm:$0xf]
      %v231 = vld [vmem:[%s219 + $0x14] sm:$0xf]
      %v232 = vld [vmem:[%s219 + $0x18] sm:$0xf]
      %v233 = vld [vmem:[%s219 + $0x1c] sm:$0xf]
      %v234 = vld [vmem:[%s219 + $0x20] sm:$0xf]
      %v235 = vld [vmem:[%s219 + $0x24] sm:$0xf]
      %v236 = vld [vmem:[%s219 + $0x28] sm:$0xf]
      %v237 = vld [vmem:[%s219 + $0x2c] sm:$0xf]
      %v238 = vld [vmem:[%s219 + $0x30] sm:$0xf]
      %v239 = vld [vmem:[%s219 + $0x34] sm:$0xf]
      %v240 = vld [vmem:[%s219 + $0x38] sm:$0xf]
      %v241 = vld [vmem:[%s219 + $0x3c] sm:$0xf]
      %v242 = vld [vmem:[%s1] sm:$0xf]
      %v243 = vld [vmem:[%s1 + $0x4] sm:$0xf]
      %v244 = vld [vmem:[%s1 + $0x8] sm:$0xf]
      %v245 = vld [vmem:[%s1 + $0xc] sm:$0xf]
      %v246 = vld [vmem:[%s2] sm:$0x1]
      %v248 = vlaneseq
      %v249 = vshrl.u32 %v248, 7
      %v250 = vsub.s32 0, %v249
      %v251 = vrot.slane %v246, %v250
      %v269 = vunpack.c.l.b16 %v226
      %v270 = vunpack.c.l.b16 %v227
      %v271 = vunpack.c.l.b16 %v228
      %v272 = vunpack.c.l.b16 %v229
      %v273 = vunpack.c.l.b16 %v230
      %v274 = vunpack.c.l.b16 %v231
      %v275 = vunpack.c.l.b16 %v232
      %v276 = vunpack.c.l.b16 %v233
      %v277 = vunpack.c.l.b16 %v234
      %v278 = vunpack.c.l.b16 %v235
      %v279 = vunpack.c.l.b16 %v236
      %v280 = vunpack.c.l.b16 %v237
      %v281 = vunpack.c.l.b16 %v238
      %v282 = vunpack.c.l.b16 %v239
      %v283 = vunpack.c.l.b16 %v240
      %v284 = vunpack.c.l.b16 %v241
      %v285 = vpack.c.b16 %v270, %v269
      %v286 = vpack.c.b16 %v272, %v271
      %v287 = vpack.c.b16 %v274, %v273
      %v288 = vpack.c.b16 %v276, %v275
      %v289 = vpack.c.b16 %v278, %v277
      %v290 = vpack.c.b16 %v280, %v279
      %v291 = vpack.c.b16 %v282, %v281
      %v292 = vpack.c.b16 %v284, %v283
      %v297 = vunpack.c.l.b16 %v242
      %v298 = vunpack.c.l.b16 %v243
      %v299 = vunpack.c.l.b16 %v244
      %v300 = vunpack.c.l.b16 %v245
      %v301 = vpack.c.b16 %v298, %v297
      %v302 = vpack.c.b16 %v300, %v299
      %vm305 = vcmask 261120
      %v307 = vsel %vm305, %v285, 0
      %v310 = vsel %vm305, %v286, 0
      %v313 = vsel %vm305, %v287, 0
      %v316 = vsel %vm305, %v288, 0
      %v319 = vsel %vm305, %v289, 0
      %v322 = vsel %vm305, %v290, 0
      %v325 = vsel %vm305, %v291, 0
      %v328 = vsel %vm305, %v292, 0
      %330 = vmatprep.subr.bf16.mxu0 0
      %331 = vmatpush1.bf16.msra.mxu0 %v301
      %332 = vmatprep.subr.bf16.mxu0 0
      %333 = vmatpush1.bf16.msra.mxu0 %v302
      %334 = vmatprep.subr.bf16.mxu0 0
      %335 = vmatpush1.bf16.msra.mxu0 0
      %336 = vmatprep.subr.bf16.mxu0 0
      %337 = vmatpush1.bf16.msra.mxu0 0
      %338 = vmatprep.subr.bf16.mxu0 0
      %339 = vmatpush1.bf16.msra.mxu0 0
      %340 = vmatprep.subr.bf16.mxu0 0
      %341 = vmatpush1.bf16.msra.mxu0 0
      %342 = vmatprep.subr.bf16.mxu0 0
      %343 = vmatpush1.bf16.msra.mxu0 0
      %344 = vmatprep.subr.bf16.mxu0 0
      %345 = vmatpush1.bf16.msra.mxu0 0
      %346 = vmatprep.subr.bf16.mxu0 0
      %347 = vmatpush1.bf16.msra.mxu0 0
      %348 = vmatprep.subr.bf16.mxu0 0
      %349 = vmatpush1.bf16.msra.mxu0 0
      %350 = vmatprep.subr.bf16.mxu0 0
      %351 = vmatpush1.bf16.msra.mxu0 0
      %352 = vmatprep.subr.bf16.mxu0 0
      %353 = vmatpush1.bf16.msra.mxu0 0
      %354 = vmatprep.subr.bf16.mxu0 0
      %355 = vmatpush1.bf16.msra.mxu0 0
      %356 = vmatprep.subr.bf16.mxu0 0
      %357 = vmatpush1.bf16.msra.mxu0 0
      %358 = vmatprep.subr.bf16.mxu0 0
      %359 = vmatpush1.bf16.msra.mxu0 0
      %360 = vmatprep.subr.bf16.mxu0 0
      %361 = vmatpush1.bf16.msra.mxu0 0
      %362 = vmatprep.mubr.bf16.mxu0 0
      %363 = vmatmul.mubr.bf16.gmra.mrb[0].mxu0 %v307
      %v364 = vpop.f32.mrb[0].mxu0
      %v365 = vadd.f32 %v251, %v364
      %v366 = vpop.f32.mrb[0].mxu0
      %v367 = vpop.f32.mrb[0].mxu0
      %v368 = vadd.f32 %v251, %v367
      %v369 = vpop.f32.mrb[0].mxu0
      %370 = vmatprep.mubr.bf16.mxu0 0
      %371 = vmatmul.mubr.bf16.gmra.mrb[0].mxu0 %v310
      %v372 = vpop.f32.mrb[0].mxu0
      %v373 = vadd.f32 %v251, %v372
      %v374 = vpop.f32.mrb[0].mxu0
      %v375 = vpop.f32.mrb[0].mxu0
      %v376 = vadd.f32 %v251, %v375
      %v377 = vpop.f32.mrb[0].mxu0
      %378 = vmatprep.mubr.bf16.mxu0 0
      %379 = vmatmul.mubr.bf16.gmra.mrb[0].mxu0 %v313
      %v380 = vpop.f32.mrb[0].mxu0
      %v381 = vadd.f32 %v251, %v380
      %v382 = vpop.f32.mrb[0].mxu0
      %v383 = vpop.f32.mrb[0].mxu0
      %v384 = vadd.f32 %v251, %v383
      %v385 = vpop.f32.mrb[0].mxu0
      %386 = vmatprep.mubr.bf16.mxu0 0
      %387 = vmatmul.mubr.bf16.gmra.mrb[0].mxu0 %v316
      %v388 = vpop.f32.mrb[0].mxu0
      %v389 = vadd.f32 %v251, %v388
      %v390 = vpop.f32.mrb[0].mxu0
      %v391 = vpop.f32.mrb[0].mxu0
      %v392 = vadd.f32 %v251, %v391
      %v393 = vpop.f32.mrb[0].mxu0
      %394 = vmatprep.mubr.bf16.mxu0 0
      %395 = vmatmul.mubr.bf16.gmra.mrb[0].mxu0 %v319
      %v396 = vpop.f32.mrb[0].mxu0
      %v397 = vadd.f32 %v251, %v396
      %v398 = vpop.f32.mrb[0].mxu0
      %v399 = vpop.f32.mrb[0].mxu0
      %v400 = vadd.f32 %v251, %v399
      %v401 = vpop.f32.mrb[0].mxu0
      %402 = vmatprep.mubr.bf16.mxu0 0
      %403 = vmatmul.mubr.bf16.gmra.mrb[0].mxu0 %v322
      %v404 = vpop.f32.mrb[0].mxu0
      %v405 = vadd.f32 %v251, %v404
      %v406 = vpop.f32.mrb[0].mxu0
      %v407 = vpop.f32.mrb[0].mxu0
      %v408 = vadd.f32 %v251, %v407
      %v409 = vpop.f32.mrb[0].mxu0
      %410 = vmatprep.mubr.bf16.mxu0 0
      %411 = vmatmul.mubr.bf16.gmra.mrb[0].mxu0 %v325
      %v412 = vpop.f32.mrb[0].mxu0
      %v413 = vadd.f32 %v251, %v412
      %v414 = vpop.f32.mrb[0].mxu0
      %v415 = vpop.f32.mrb[0].mxu0
      %v416 = vadd.f32 %v251, %v415
      %v417 = vpop.f32.mrb[0].mxu0
      %418 = vmatprep.mubr.bf16.mxu0 0
      %419 = vmatmul.mubr.bf16.gmra.mrb[0].mxu0 %v328
      %v420 = vpop.f32.mrb[0].mxu0
      %v421 = vadd.f32 %v251, %v420
      %v422 = vpop.f32.mrb[0].mxu0
      %v423 = vpop.f32.mrb[0].mxu0
      %v424 = vadd.f32 %v251, %v423
      %v425 = vpop.f32.mrb[0].mxu0
      %426 = vdwg.mxu0
      %v427 = vpack.c.bf16 %v368, %v365
      %v428 = vpack.c.bf16 %v376, %v373
      %v429 = vpack.c.bf16 %v384, %v381
      %v430 = vpack.c.bf16 %v392, %v389
      %v431 = vpack.c.bf16 %v400, %v397
      %v432 = vpack.c.bf16 %v408, %v405
      %v433 = vpack.c.bf16 %v416, %v413
      %v434 = vpack.c.bf16 %v424, %v421
      %v435 = vlaneseq
      %v436 = vand.u32 %v435, 127
      %vm437 = vcmp.lt.s32.totalorder %v436, 8
      %v438 = vsel %vm437, 0.0, -1e+30
      %447 = vrot.lane.b32.xlu0 %v427, 96
      %v448 = vpop.permute.xlu0 %447
      %449 = vrot.lane.b32.xlu0 %v428, 96
      %v450 = vpop.permute.xlu0 %449
      %451 = vrot.lane.b32.xlu0 %v429, 96
      %v452 = vpop.permute.xlu0 %451
      %453 = vrot.lane.b32.xlu0 %v430, 96
      %v454 = vpop.permute.xlu0 %453
      %455 = vrot.lane.b32.xlu0 %v431, 96
      %v456 = vpop.permute.xlu0 %455
      %457 = vrot.lane.b32.xlu0 %v432, 96
      %v458 = vpop.permute.xlu0 %457
      %459 = vrot.lane.b32.xlu0 %v433, 96
      %v460 = vpop.permute.xlu0 %459
      %461 = vrot.lane.b32.xlu0 %v434, 96
      %v462 = vpop.permute.xlu0 %461
      %vm463 = vcmask 64512
      %v465 = vsel %vm463, %v427, 0
      %v468 = vsel %vm463, %v428, 0
      %v471 = vsel %vm463, %v429, 0
      %v474 = vsel %vm463, %v430, 0
      %v477 = vsel %vm463, %v431, 0
      %v480 = vsel %vm463, %v432, 0
      %v483 = vsel %vm463, %v433, 0
      %v486 = vsel %vm463, %v434, 0
      %v489 = vsel %vm463, %v448, 0
      %v492 = vsel %vm463, %v450, 0
      %v495 = vsel %vm463, %v452, 0
      %v498 = vsel %vm463, %v454, 0
      %v501 = vsel %vm463, %v456, 0
      %v504 = vsel %vm463, %v458, 0
      %v507 = vsel %vm463, %v460, 0
      %v510 = vsel %vm463, %v462, 0
      %512 = vmatprep.subr.bf16.mxu0 0
      %513 = vmatpush1.bf16.xpose.msra.mxu0 %v489
      %514 = vmatprep.subr.bf16.mxu0 0
      %515 = vmatpush1.bf16.xpose.msra.mxu0 %v492
      %516 = vmatprep.subr.bf16.mxu0 0
      %517 = vmatpush1.bf16.xpose.msra.mxu0 %v495
      %518 = vmatprep.subr.bf16.mxu0 0
      %519 = vmatpush1.bf16.xpose.msra.mxu0 %v498
      %520 = vmatprep.subr.bf16.mxu0 0
      %521 = vmatpush1.bf16.xpose.msra.mxu0 %v501
      %522 = vmatprep.subr.bf16.mxu0 0
      %523 = vmatpush1.bf16.xpose.msra.mxu0 %v504
      %524 = vmatprep.subr.bf16.mxu0 0
      %525 = vmatpush1.bf16.xpose.msra.mxu0 %v507
      %526 = vmatprep.subr.bf16.mxu0 0
      %527 = vmatpush1.bf16.xpose.msra.mxu0 %v510
      %528 = vmatprep.subr.bf16.mxu0 0
      %529 = vmatpush1.bf16.xpose.msra.mxu0 0
      %530 = vmatprep.subr.bf16.mxu0 0
      %531 = vmatpush1.bf16.xpose.msra.mxu0 0
      %532 = vmatprep.subr.bf16.mxu0 0
      %533 = vmatpush1.bf16.xpose.msra.mxu0 0
      %534 = vmatprep.subr.bf16.mxu0 0
      %535 = vmatpush1.bf16.xpose.msra.mxu0 0
      %536 = vmatprep.subr.bf16.mxu0 0
      %537 = vmatpush1.bf16.xpose.msra.mxu0 0
      %538 = vmatprep.subr.bf16.mxu0 0
      %539 = vmatpush1.bf16.xpose.msra.mxu0 0
      %540 = vmatprep.subr.bf16.mxu0 0
      %541 = vmatpush1.bf16.xpose.msra.mxu0 0
      %542 = vmatprep.subr.bf16.mxu0 0
      %543 = vmatpush1.bf16.xpose.msra.mxu0 0
      %544 = vmatprep.mubr.bf16.mxu0 0
      %545 = vmatmul.mubr.bf16.gmra.mrb[0].mxu0 %v465
      %v546 = vpop.f32.mrb[0].mxu0
      %v547 = vadd.f32 %v438, %v546
      %v548 = vpop.f32.mrb[0].mxu0
      %v549 = vpop.f32.mrb[0].mxu0
      %v550 = vadd.f32 %v438, %v549
      %v551 = vpop.f32.mrb[0].mxu0
      %552 = vmatprep.mubr.bf16.mxu0 0
      %553 = vmatmul.mubr.bf16.gmra.mrb[0].mxu0 %v468
      %v554 = vpop.f32.mrb[0].mxu0
      %v555 = vadd.f32 %v438, %v554
      %v556 = vpop.f32.mrb[0].mxu0
      %v557 = vpop.f32.mrb[0].mxu0
      %v558 = vadd.f32 %v438, %v557
      %v559 = vpop.f32.mrb[0].mxu0
      %560 = vmatprep.mubr.bf16.mxu0 0
      %561 = vmatmul.mubr.bf16.gmra.mrb[0].mxu0 %v471
      %v562 = vpop.f32.mrb[0].mxu0
      %v563 = vadd.f32 %v438, %v562
      %v564 = vpop.f32.mrb[0].mxu0
      %v565 = vpop.f32.mrb[0].mxu0
      %v566 = vadd.f32 %v438, %v565
      %v567 = vpop.f32.mrb[0].mxu0
      %568 = vmatprep.mubr.bf16.mxu0 0
      %569 = vmatmul.mubr.bf16.gmra.mrb[0].mxu0 %v474
      %v570 = vpop.f32.mrb[0].mxu0
      %v571 = vadd.f32 %v438, %v570
      %v572 = vpop.f32.mrb[0].mxu0
      %v573 = vpop.f32.mrb[0].mxu0
      %v574 = vadd.f32 %v438, %v573
      %v575 = vpop.f32.mrb[0].mxu0
      %576 = vmatprep.mubr.bf16.mxu0 0
      %577 = vmatmul.mubr.bf16.gmra.mrb[0].mxu0 %v477
      %v578 = vpop.f32.mrb[0].mxu0
      %v579 = vadd.f32 %v438, %v578
      %v580 = vpop.f32.mrb[0].mxu0
      %v581 = vpop.f32.mrb[0].mxu0
      %v582 = vadd.f32 %v438, %v581
      %v583 = vpop.f32.mrb[0].mxu0
      %584 = vmatprep.mubr.bf16.mxu0 0
      %585 = vmatmul.mubr.bf16.gmra.mrb[0].mxu0 %v480
      %v586 = vpop.f32.mrb[0].mxu0
      %v587 = vadd.f32 %v438, %v586
      %v588 = vpop.f32.mrb[0].mxu0
      %v589 = vpop.f32.mrb[0].mxu0
      %v590 = vadd.f32 %v438, %v589
      %v591 = vpop.f32.mrb[0].mxu0
      %592 = vmatprep.mubr.bf16.mxu0 0
      %593 = vmatmul.mubr.bf16.gmra.mrb[0].mxu0 %v483
      %v594 = vpop.f32.mrb[0].mxu0
      %v595 = vadd.f32 %v438, %v594
      %v596 = vpop.f32.mrb[0].mxu0
      %v597 = vpop.f32.mrb[0].mxu0
      %v598 = vadd.f32 %v438, %v597
      %v599 = vpop.f32.mrb[0].mxu0
      %600 = vmatprep.mubr.bf16.mxu0 0
      %601 = vmatmul.mubr.bf16.gmra.mrb[0].mxu0 %v486
      %v602 = vpop.f32.mrb[0].mxu0
      %v603 = vadd.f32 %v438, %v602
      %v604 = vpop.f32.mrb[0].mxu0
      %v605 = vpop.f32.mrb[0].mxu0
      %v606 = vadd.f32 %v438, %v605
      %v607 = vpop.f32.mrb[0].mxu0
      %608 = vdwg.mxu0
      %609 = vmax.xlane.f32.xlu0 %v547
      %v610 = vpop.xlane.xlu0 %609
      %611 = vmax.xlane.f32.xlu0 %v550
      %v612 = vpop.xlane.xlu0 %611
      %613 = vmax.xlane.f32.xlu0 %v555
      %v614 = vpop.xlane.xlu0 %613
      %615 = vmax.xlane.f32.xlu0 %v558
      %v616 = vpop.xlane.xlu0 %615
      %617 = vmax.xlane.f32.xlu0 %v563
      %v618 = vpop.xlane.xlu0 %617
      %619 = vmax.xlane.f32.xlu0 %v566
      %v620 = vpop.xlane.xlu0 %619
      %621 = vmax.xlane.f32.xlu0 %v571
      %v622 = vpop.xlane.xlu0 %621
      %623 = vmax.xlane.f32.xlu0 %v574
      %v624 = vpop.xlane.xlu0 %623
      %625 = vmax.xlane.f32.xlu0 %v579
      %v626 = vpop.xlane.xlu0 %625
      %627 = vmax.xlane.f32.xlu0 %v582
      %v628 = vpop.xlane.xlu0 %627
      %629 = vmax.xlane.f32.xlu0 %v587
      %v630 = vpop.xlane.xlu0 %629
      %631 = vmax.xlane.f32.xlu0 %v590
      %v632 = vpop.xlane.xlu0 %631
      %633 = vmax.xlane.f32.xlu0 %v595
      %v634 = vpop.xlane.xlu0 %633
      %635 = vmax.xlane.f32.xlu0 %v598
      %v636 = vpop.xlane.xlu0 %635
      %637 = vmax.xlane.f32.xlu0 %v603
      %v638 = vpop.xlane.xlu0 %637
      %639 = vmax.xlane.f32.xlu0 %v606
      %v640 = vpop.xlane.xlu0 %639
      %v641 = vsub.f32 %v547, %v610
      %v642 = vsub.f32 %v550, %v612
      %v643 = vsub.f32 %v555, %v614
      %v644 = vsub.f32 %v558, %v616
      %v645 = vsub.f32 %v563, %v618
      %v646 = vsub.f32 %v566, %v620
      %v647 = vsub.f32 %v571, %v622
      %v648 = vsub.f32 %v574, %v624
      %v649 = vsub.f32 %v579, %v626
      %v650 = vsub.f32 %v582, %v628
      %v651 = vsub.f32 %v587, %v630
      %v652 = vsub.f32 %v590, %v632
      %v653 = vsub.f32 %v595, %v634
      %v654 = vsub.f32 %v598, %v636
      %v655 = vsub.f32 %v603, %v638
      %v656 = vsub.f32 %v606, %v640
      %v657 = vmul.f32 %v641, 1.442695
      %v658 = vpow.pop %v657
      %v659 = vmul.f32 %v642, 1.442695
      %v660 = vpow.pop %v659
      %v661 = vmul.f32 %v643, 1.442695
      %v662 = vpow.pop %v661
      %v663 = vmul.f32 %v644, 1.442695
      %v664 = vpow.pop %v663
      %v665 = vmul.f32 %v645, 1.442695
      %v666 = vpow.pop %v665
      %v667 = vmul.f32 %v646, 1.442695
      %v668 = vpow.pop %v667
      %v669 = vmul.f32 %v647, 1.442695
      %v670 = vpow.pop %v669
      %v671 = vmul.f32 %v648, 1.442695
      %v672 = vpow.pop %v671
      %v673 = vmul.f32 %v649, 1.442695
      %v674 = vpow.pop %v673
      %v675 = vmul.f32 %v650, 1.442695
      %v676 = vpow.pop %v675
      %v677 = vmul.f32 %v651, 1.442695
      %v678 = vpow.pop %v677
      %v679 = vmul.f32 %v652, 1.442695
      %v680 = vpow.pop %v679
      %v681 = vmul.f32 %v653, 1.442695
      %v682 = vpow.pop %v681
      %v683 = vmul.f32 %v654, 1.442695
      %v684 = vpow.pop %v683
      %v685 = vmul.f32 %v655, 1.442695
      %v686 = vpow.pop %v685
      %v687 = vmul.f32 %v656, 1.442695
      %v688 = vpow.pop %v687
      %689 = vadd.xlane.f32.xlu0 %v658
      %v690 = vpop.xlane.xlu0 %689
      %691 = vadd.xlane.f32.xlu0 %v660
      %v692 = vpop.xlane.xlu0 %691
      %693 = vadd.xlane.f32.xlu0 %v662
      %v694 = vpop.xlane.xlu0 %693
      %695 = vadd.xlane.f32.xlu0 %v664
      %v696 = vpop.xlane.xlu0 %695
      %697 = vadd.xlane.f32.xlu0 %v666
      %v698 = vpop.xlane.xlu0 %697
      %699 = vadd.xlane.f32.xlu0 %v668
      %v700 = vpop.xlane.xlu0 %699
      %701 = vadd.xlane.f32.xlu0 %v670
      %v702 = vpop.xlane.xlu0 %701
      %703 = vadd.xlane.f32.xlu0 %v672
      %v704 = vpop.xlane.xlu0 %703
      %705 = vadd.xlane.f32.xlu0 %v674
      %v706 = vpop.xlane.xlu0 %705
      %707 = vadd.xlane.f32.xlu0 %v676
      %v708 = vpop.xlane.xlu0 %707
      %709 = vadd.xlane.f32.xlu0 %v678
      %v710 = vpop.xlane.xlu0 %709
      %711 = vadd.xlane.f32.xlu0 %v680
      %v712 = vpop.xlane.xlu0 %711
      %713 = vadd.xlane.f32.xlu0 %v682
      %v714 = vpop.xlane.xlu0 %713
      %715 = vadd.xlane.f32.xlu0 %v684
      %v716 = vpop.xlane.xlu0 %715
      %717 = vadd.xlane.f32.xlu0 %v686
      %v718 = vpop.xlane.xlu0 %717
      %719 = vadd.xlane.f32.xlu0 %v688
      %v720 = vpop.xlane.xlu0 %719
      %v721 = vrcp.pop %v690
      %v722 = vrcp.pop %v692
      %v723 = vrcp.pop %v694
      %v724 = vrcp.pop %v696
      %v725 = vrcp.pop %v698
      %v726 = vrcp.pop %v700
      %v727 = vrcp.pop %v702
      %v728 = vrcp.pop %v704
      %v729 = vrcp.pop %v706
      %v730 = vrcp.pop %v708
      %v731 = vrcp.pop %v710
      %v732 = vrcp.pop %v712
      %v733 = vrcp.pop %v714
      %v734 = vrcp.pop %v716
      %v735 = vrcp.pop %v718
      %v736 = vrcp.pop %v720
      %v737 = vmul.f32 %v658, %v721
      %v738 = vmul.f32 %v660, %v722
      %v739 = vmul.f32 %v662, %v723
      %v740 = vmul.f32 %v664, %v724
      %v741 = vmul.f32 %v666, %v725
      %v742 = vmul.f32 %v668, %v726
      %v743 = vmul.f32 %v670, %v727
      %v744 = vmul.f32 %v672, %v728
      %v745 = vmul.f32 %v674, %v729
      %v746 = vmul.f32 %v676, %v730
      %v747 = vmul.f32 %v678, %v731
      %v748 = vmul.f32 %v680, %v732
      %v749 = vmul.f32 %v682, %v733
      %v750 = vmul.f32 %v684, %v734
      %v751 = vmul.f32 %v686, %v735
      %v752 = vmul.f32 %v688, %v736
      %v753 = vpack.c.bf16 %v738, %v737
      %v754 = vpack.c.bf16 %v740, %v739
      %v755 = vpack.c.bf16 %v742, %v741
      %v756 = vpack.c.bf16 %v744, %v743
      %v757 = vpack.c.bf16 %v746, %v745
      %v758 = vpack.c.bf16 %v748, %v747
      %v759 = vpack.c.bf16 %v750, %v749
      %v760 = vpack.c.bf16 %v752, %v751
      %761 = vrot.lane.b32.xlu0 %v427, 64
      %v762 = vpop.permute.xlu0 %761
      %763 = vrot.lane.b32.xlu0 %v428, 64
      %v764 = vpop.permute.xlu0 %763
      %765 = vrot.lane.b32.xlu0 %v429, 64
      %v766 = vpop.permute.xlu0 %765
      %767 = vrot.lane.b32.xlu0 %v430, 64
      %v768 = vpop.permute.xlu0 %767
      %769 = vrot.lane.b32.xlu0 %v431, 64
      %v770 = vpop.permute.xlu0 %769
      %771 = vrot.lane.b32.xlu0 %v432, 64
      %v772 = vpop.permute.xlu0 %771
      %773 = vrot.lane.b32.xlu0 %v433, 64
      %v774 = vpop.permute.xlu0 %773
      %775 = vrot.lane.b32.xlu0 %v434, 64
      %v776 = vpop.permute.xlu0 %775
      %785 = vmatprep.subr.bf16.mxu0 0
      %786 = vmatpush1.bf16.msra.mxu0 %v762
      %787 = vmatprep.subr.bf16.mxu0 0
      %788 = vmatpush1.bf16.msra.mxu0 %v764
      %789 = vmatprep.subr.bf16.mxu0 0
      %790 = vmatpush1.bf16.msra.mxu0 %v766
      %791 = vmatprep.subr.bf16.mxu0 0
      %792 = vmatpush1.bf16.msra.mxu0 %v768
      %793 = vmatprep.subr.bf16.mxu0 0
      %794 = vmatpush1.bf16.msra.mxu0 %v770
      %795 = vmatprep.subr.bf16.mxu0 0
      %796 = vmatpush1.bf16.msra.mxu0 %v772
      %797 = vmatprep.subr.bf16.mxu0 0
      %798 = vmatpush1.bf16.msra.mxu0 %v774
      %799 = vmatprep.subr.bf16.mxu0 0
      %800 = vmatpush1.bf16.msra.mxu0 %v776
      %801 = vmatprep.subr.bf16.mxu0 0
      %802 = vmatpush1.bf16.msra.mxu0 0
      %803 = vmatprep.subr.bf16.mxu0 0
      %804 = vmatpush1.bf16.msra.mxu0 0
      %805 = vmatprep.subr.bf16.mxu0 0
      %806 = vmatpush1.bf16.msra.mxu0 0
      %807 = vmatprep.subr.bf16.mxu0 0
      %808 = vmatpush1.bf16.msra.mxu0 0
      %809 = vmatprep.subr.bf16.mxu0 0
      %810 = vmatpush1.bf16.msra.mxu0 0
      %811 = vmatprep.subr.bf16.mxu0 0
      %812 = vmatpush1.bf16.msra.mxu0 0
      %813 = vmatprep.subr.bf16.mxu0 0
      %814 = vmatpush1.bf16.msra.mxu0 0
      %815 = vmatprep.subr.bf16.mxu0 0
      %816 = vmatpush1.bf16.msra.mxu0 0
      %817 = vmatprep.mubr.bf16.mxu0 0
      %818 = vmatmul.mubr.bf16.gmra.mrb[0].mxu0 %v753
      %v819 = vpop.f32.mrb[0].mxu0
      %v820 = vadd.f32 0.0, %v819
      %v821 = vpop.f32.mrb[0].mxu0
      %v822 = vpop.f32.mrb[0].mxu0
      %v823 = vadd.f32 0.0, %v822
      %v824 = vpop.f32.mrb[0].mxu0
      %825 = vmatprep.mubr.bf16.mxu0 0
      %826 = vmatmul.mubr.bf16.gmra.mrb[0].mxu0 %v754
      %v827 = vpop.f32.mrb[0].mxu0
      %v828 = vadd.f32 0.0, %v827
      %v829 = vpop.f32.mrb[0].mxu0
      %v830 = vpop.f32.mrb[0].mxu0
      %v831 = vadd.f32 0.0, %v830
      %v832 = vpop.f32.mrb[0].mxu0
      %833 = vmatprep.mubr.bf16.mxu0 0
      %834 = vmatmul.mubr.bf16.gmra.mrb[0].mxu0 %v755
      %v835 = vpop.f32.mrb[0].mxu0
      %v836 = vadd.f32 0.0, %v835
      %v837 = vpop.f32.mrb[0].mxu0
      %v838 = vpop.f32.mrb[0].mxu0
      %v839 = vadd.f32 0.0, %v838
      %v840 = vpop.f32.mrb[0].mxu0
      %841 = vmatprep.mubr.bf16.mxu0 0
      %842 = vmatmul.mubr.bf16.gmra.mrb[0].mxu0 %v756
      %v843 = vpop.f32.mrb[0].mxu0
      %v844 = vadd.f32 0.0, %v843
      %v845 = vpop.f32.mrb[0].mxu0
      %v846 = vpop.f32.mrb[0].mxu0
      %v847 = vadd.f32 0.0, %v846
      %v848 = vpop.f32.mrb[0].mxu0
      %849 = vmatprep.mubr.bf16.mxu0 0
      %850 = vmatmul.mubr.bf16.gmra.mrb[0].mxu0 %v757
      %v851 = vpop.f32.mrb[0].mxu0
      %v852 = vadd.f32 0.0, %v851
      %v853 = vpop.f32.mrb[0].mxu0
      %v854 = vpop.f32.mrb[0].mxu0
      %v855 = vadd.f32 0.0, %v854
      %v856 = vpop.f32.mrb[0].mxu0
      %857 = vmatprep.mubr.bf16.mxu0 0
      %858 = vmatmul.mubr.bf16.gmra.mrb[0].mxu0 %v758
      %v859 = vpop.f32.mrb[0].mxu0
      %v860 = vadd.f32 0.0, %v859
      %v861 = vpop.f32.mrb[0].mxu0
      %v862 = vpop.f32.mrb[0].mxu0
      %v863 = vadd.f32 0.0, %v862
      %v864 = vpop.f32.mrb[0].mxu0
      %865 = vmatprep.mubr.bf16.mxu0 0
      %866 = vmatmul.mubr.bf16.gmra.mrb[0].mxu0 %v759
      %v867 = vpop.f32.mrb[0].mxu0
      %v868 = vadd.f32 0.0, %v867
      %v869 = vpop.f32.mrb[0].mxu0
      %v870 = vpop.f32.mrb[0].mxu0
      %v871 = vadd.f32 0.0, %v870
      %v872 = vpop.f32.mrb[0].mxu0
      %873 = vmatprep.mubr.bf16.mxu0 0
      %874 = vmatmul.mubr.bf16.gmra.mrb[0].mxu0 %v760
      %v875 = vpop.f32.mrb[0].mxu0
      %v876 = vadd.f32 0.0, %v875
      %v877 = vpop.f32.mrb[0].mxu0
      %v878 = vpop.f32.mrb[0].mxu0
      %v879 = vadd.f32 0.0, %v878
      %v880 = vpop.f32.mrb[0].mxu0
      %881 = vdwg.mxu0
      %v882 = vpack.c.bf16 %v823, %v820
      %v883 = vpack.c.bf16 %v831, %v828
      %v884 = vpack.c.bf16 %v839, %v836
      %v885 = vpack.c.bf16 %v847, %v844
      %v886 = vpack.c.bf16 %v855, %v852
      %v887 = vpack.c.bf16 %v863, %v860
      %v888 = vpack.c.bf16 %v871, %v868
      %v889 = vpack.c.bf16 %v879, %v876
      %890 = vst.msk [vmem:[#allocation2] sm:$0xff] %vm463, %v882
      %891 = vst.msk [vmem:[#allocation2 + $0x8] sm:$0xff] %vm463, %v883
      %892 = vst.msk [vmem:[#allocation2 + $0x10] sm:$0xff] %vm463, %v884
      %893 = vst.msk [vmem:[#allocation2 + $0x18] sm:$0xff] %vm463, %v885
      %894 = vst.msk [vmem:[#allocation2 + $0x20] sm:$0xff] %vm463, %v886
      %895 = vst.msk [vmem:[#allocation2 + $0x28] sm:$0xff] %vm463, %v887
      %896 = vst.msk [vmem:[#allocation2 + $0x30] sm:$0xff] %vm463, %v888
      %897 = vst.msk [vmem:[#allocation2 + $0x38] sm:$0xff] %vm463, %v889
      %898 = vrot.lane.b32.xlu0 %v427, 120
      %v899 = vpop.permute.xlu0 %898
      %900 = vrot.lane.b32.xlu0 %v428, 120
      %v901 = vpop.permute.xlu0 %900
      %902 = vrot.lane.b32.xlu0 %v429, 120
      %v903 = vpop.permute.xlu0 %902
      %904 = vrot.lane.b32.xlu0 %v430, 120
      %v905 = vpop.permute.xlu0 %904
      %906 = vrot.lane.b32.xlu0 %v431, 120
      %v907 = vpop.permute.xlu0 %906
      %908 = vrot.lane.b32.xlu0 %v432, 120
      %v909 = vpop.permute.xlu0 %908
      %910 = vrot.lane.b32.xlu0 %v433, 120
      %v911 = vpop.permute.xlu0 %910
      %912 = vrot.lane.b32.xlu0 %v434, 120
      %v913 = vpop.permute.xlu0 %912
      %914 = vrot.lane.b32.xlu0 %v427, 88
      %v915 = vpop.permute.xlu0 %914
      %916 = vrot.lane.b32.xlu0 %v428, 88
      %v917 = vpop.permute.xlu0 %916
      %918 = vrot.lane.b32.xlu0 %v429, 88
      %v919 = vpop.permute.xlu0 %918
      %920 = vrot.lane.b32.xlu0 %v430, 88
      %v921 = vpop.permute.xlu0 %920
      %922 = vrot.lane.b32.xlu0 %v431, 88
      %v923 = vpop.permute.xlu0 %922
      %924 = vrot.lane.b32.xlu0 %v432, 88
      %v925 = vpop.permute.xlu0 %924
      %926 = vrot.lane.b32.xlu0 %v433, 88
      %v927 = vpop.permute.xlu0 %926
      %928 = vrot.lane.b32.xlu0 %v434, 88
      %v929 = vpop.permute.xlu0 %928
      %v931 = vsel %vm463, %v899, 0
      %v934 = vsel %vm463, %v901, 0
      %v937 = vsel %vm463, %v903, 0
      %v940 = vsel %vm463, %v905, 0
      %v943 = vsel %vm463, %v907, 0
      %v946 = vsel %vm463, %v909, 0
      %v949 = vsel %vm463, %v911, 0
      %v952 = vsel %vm463, %v913, 0
      %v955 = vsel %vm463, %v915, 0
      %v958 = vsel %vm463, %v917, 0
      %v961 = vsel %vm463, %v919, 0
      %v964 = vsel %vm463, %v921, 0
      %v967 = vsel %vm463, %v923, 0
      %v970 = vsel %vm463, %v925, 0
      %v973 = vsel %vm463, %v927, 0
      %v976 = vsel %vm463, %v929, 0
      %978 = vmatprep.subr.bf16.mxu0 0
      %979 = vmatpush1.bf16.xpose.msra.mxu0 %v955
      %980 = vmatprep.subr.bf16.mxu0 0
      %981 = vmatpush1.bf16.xpose.msra.mxu0 %v958
      %982 = vmatprep.subr.bf16.mxu0 0
      %983 = vmatpush1.bf16.xpose.msra.mxu0 %v961
      %984 = vmatprep.subr.bf16.mxu0 0
      %985 = vmatpush1.bf16.xpose.msra.mxu0 %v964
      %986 = vmatprep.subr.bf16.mxu0 0
      %987 = vmatpush1.bf16.xpose.msra.mxu0 %v967
      %988 = vmatprep.subr.bf16.mxu0 0
      %989 = vmatpush1.bf16.xpose.msra.mxu0 %v970
      %990 = vmatprep.subr.bf16.mxu0 0
      %991 = vmatpush1.bf16.xpose.msra.mxu0 %v973
      %992 = vmatprep.subr.bf16.mxu0 0
      %993 = vmatpush1.bf16.xpose.msra.mxu0 %v976
      %994 = vmatprep.subr.bf16.mxu0 0
      %995 = vmatpush1.bf16.xpose.msra.mxu0 0
      %996 = vmatprep.subr.bf16.mxu0 0
      %997 = vmatpush1.bf16.xpose.msra.mxu0 0
      %998 = vmatprep.subr.bf16.mxu0 0
      %999 = vmatpush1.bf16.xpose.msra.mxu0 0
      %1000 = vmatprep.subr.bf16.mxu0 0
      %1001 = vmatpush1.bf16.xpose.msra.mxu0 0
      %1002 = vmatprep.subr.bf16.mxu0 0
      %1003 = vmatpush1.bf16.xpose.msra.mxu0 0
      %1004 = vmatprep.subr.bf16.mxu0 0
      %1005 = vmatpush1.bf16.xpose.msra.mxu0 0
      %1006 = vmatprep.subr.bf16.mxu0 0
      %1007 = vmatpush1.bf16.xpose.msra.mxu0 0
      %1008 = vmatprep.subr.bf16.mxu0 0
      %1009 = vmatpush1.bf16.xpose.msra.mxu0 0
      %1010 = vmatprep.mubr.bf16.mxu0 0
      %1011 = vmatmul.mubr.bf16.gmra.mrb[0].mxu0 %v931
      %v1012 = vpop.f32.mrb[0].mxu0
      %v1013 = vadd.f32 %v438, %v1012
      %v1014 = vpop.f32.mrb[0].mxu0
      %v1015 = vpop.f32.mrb[0].mxu0
      %v1016 = vadd.f32 %v438, %v1015
      %v1017 = vpop.f32.mrb[0].mxu0
      %1018 = vmatprep.mubr.bf16.mxu0 0
      %1019 = vmatmul.mubr.bf16.gmra.mrb[0].mxu0 %v934
      %v1020 = vpop.f32.mrb[0].mxu0
      %v1021 = vadd.f32 %v438, %v1020
      %v1022 = vpop.f32.mrb[0].mxu0
      %v1023 = vpop.f32.mrb[0].mxu0
      %v1024 = vadd.f32 %v438, %v1023
      %v1025 = vpop.f32.mrb[0].mxu0
      %1026 = vmatprep.mubr.bf16.mxu0 0
      %1027 = vmatmul.mubr.bf16.gmra.mrb[0].mxu0 %v937
      %v1028 = vpop.f32.mrb[0].mxu0
      %v1029 = vadd.f32 %v438, %v1028
      %v1030 = vpop.f32.mrb[0].mxu0
      %v1031 = vpop.f32.mrb[0].mxu0
      %v1032 = vadd.f32 %v438, %v1031
      %v1033 = vpop.f32.mrb[0].mxu0
      %1034 = vmatprep.mubr.bf16.mxu0 0
      %1035 = vmatmul.mubr.bf16.gmra.mrb[0].mxu0 %v940
      %v1036 = vpop.f32.mrb[0].mxu0
      %v1037 = vadd.f32 %v438, %v1036
      %v1038 = vpop.f32.mrb[0].mxu0
      %v1039 = vpop.f32.mrb[0].mxu0
      %v1040 = vadd.f32 %v438, %v1039
      %v1041 = vpop.f32.mrb[0].mxu0
      %1042 = vmatprep.mubr.bf16.mxu0 0
      %1043 = vmatmul.mubr.bf16.gmra.mrb[0].mxu0 %v943
      %v1044 = vpop.f32.mrb[0].mxu0
      %v1045 = vadd.f32 %v438, %v1044
      %v1046 = vpop.f32.mrb[0].mxu0
      %v1047 = vpop.f32.mrb[0].mxu0
      %v1048 = vadd.f32 %v438, %v1047
      %v1049 = vpop.f32.mrb[0].mxu0
      %1050 = vmatprep.mubr.bf16.mxu0 0
      %1051 = vmatmul.mubr.bf16.gmra.mrb[0].mxu0 %v946
      %v1052 = vpop.f32.mrb[0].mxu0
      %v1053 = vadd.f32 %v438, %v1052
      %v1054 = vpop.f32.mrb[0].mxu0
      %v1055 = vpop.f32.mrb[0].mxu0
      %v1056 = vadd.f32 %v438, %v1055
      %v1057 = vpop.f32.mrb[0].mxu0
      %1058 = vmatprep.mubr.bf16.mxu0 0
      %1059 = vmatmul.mubr.bf16.gmra.mrb[0].mxu0 %v949
      %v1060 = vpop.f32.mrb[0].mxu0
      %v1061 = vadd.f32 %v438, %v1060
      %v1062 = vpop.f32.mrb[0].mxu0
      %v1063 = vpop.f32.mrb[0].mxu0
      %v1064 = vadd.f32 %v438, %v1063
      %v1065 = vpop.f32.mrb[0].mxu0
      %1066 = vmatprep.mubr.bf16.mxu0 0
      %1067 = vmatmul.mubr.bf16.gmra.mrb[0].mxu0 %v952
      %v1068 = vpop.f32.mrb[0].mxu0
      %v1069 = vadd.f32 %v438, %v1068
      %v1070 = vpop.f32.mrb[0].mxu0
      %v1071 = vpop.f32.mrb[0].mxu0
      %v1072 = vadd.f32 %v438, %v1071
      %v1073 = vpop.f32.mrb[0].mxu0
      %1074 = vdwg.mxu0
      %1075 = vmax.xlane.f32.xlu0 %v1013
      %v1076 = vpop.xlane.xlu0 %1075
      %1077 = vmax.xlane.f32.xlu0 %v1016
      %v1078 = vpop.xlane.xlu0 %1077
      %1079 = vmax.xlane.f32.xlu0 %v1021
      %v1080 = vpop.xlane.xlu0 %1079
      %1081 = vmax.xlane.f32.xlu0 %v1024
      %v1082 = vpop.xlane.xlu0 %1081
      %1083 = vmax.xlane.f32.xlu0 %v1029
      %v1084 = vpop.xlane.xlu0 %1083
      %1085 = vmax.xlane.f32.xlu0 %v1032
      %v1086 = vpop.xlane.xlu0 %1085
      %1087 = vmax.xlane.f32.xlu0 %v1037
      %v1088 = vpop.xlane.xlu0 %1087
      %1089 = vmax.xlane.f32.xlu0 %v1040
      %v1090 = vpop.xlane.xlu0 %1089
      %1091 = vmax.xlane.f32.xlu0 %v1045
      %v1092 = vpop.xlane.xlu0 %1091
      %1093 = vmax.xlane.f32.xlu0 %v1048
      %v1094 = vpop.xlane.xlu0 %1093
      %1095 = vmax.xlane.f32.xlu0 %v1053
      %v1096 = vpop.xlane.xlu0 %1095
      %1097 = vmax.xlane.f32.xlu0 %v1056
      %v1098 = vpop.xlane.xlu0 %1097
      %1099 = vmax.xlane.f32.xlu0 %v1061
      %v1100 = vpop.xlane.xlu0 %1099
      %1101 = vmax.xlane.f32.xlu0 %v1064
      %v1102 = vpop.xlane.xlu0 %1101
      %1103 = vmax.xlane.f32.xlu0 %v1069
      %v1104 = vpop.xlane.xlu0 %1103
      %1105 = vmax.xlane.f32.xlu0 %v1072
      %v1106 = vpop.xlane.xlu0 %1105
      %v1107 = vsub.f32 %v1013, %v1076
      %v1108 = vsub.f32 %v1016, %v1078
      %v1109 = vsub.f32 %v1021, %v1080
      %v1110 = vsub.f32 %v1024, %v1082
      %v1111 = vsub.f32 %v1029, %v1084
      %v1112 = vsub.f32 %v1032, %v1086
      %v1113 = vsub.f32 %v1037, %v1088
      %v1114 = vsub.f32 %v1040, %v1090
      %v1115 = vsub.f32 %v1045, %v1092
      %v1116 = vsub.f32 %v1048, %v1094
      %v1117 = vsub.f32 %v1053, %v1096
      %v1118 = vsub.f32 %v1056, %v1098
      %v1119 = vsub.f32 %v1061, %v1100
      %v1120 = vsub.f32 %v1064, %v1102
      %v1121 = vsub.f32 %v1069, %v1104
      %v1122 = vsub.f32 %v1072, %v1106
      %v1123 = vmul.f32 %v1107, 1.442695
      %v1124 = vpow.pop %v1123
      %v1125 = vmul.f32 %v1108, 1.442695
      %v1126 = vpow.pop %v1125
      %v1127 = vmul.f32 %v1109, 1.442695
      %v1128 = vpow.pop %v1127
      %v1129 = vmul.f32 %v1110, 1.442695
      %v1130 = vpow.pop %v1129
      %v1131 = vmul.f32 %v1111, 1.442695
      %v1132 = vpow.pop %v1131
      %v1133 = vmul.f32 %v1112, 1.442695
      %v1134 = vpow.pop %v1133
      %v1135 = vmul.f32 %v1113, 1.442695
      %v1136 = vpow.pop %v1135
      %v1137 = vmul.f32 %v1114, 1.442695
      %v1138 = vpow.pop %v1137
      %v1139 = vmul.f32 %v1115, 1.442695
      %v1140 = vpow.pop %v1139
      %v1141 = vmul.f32 %v1116, 1.442695
      %v1142 = vpow.pop %v1141
      %v1143 = vmul.f32 %v1117, 1.442695
      %v1144 = vpow.pop %v1143
      %v1145 = vmul.f32 %v1118, 1.442695
      %v1146 = vpow.pop %v1145
      %v1147 = vmul.f32 %v1119, 1.442695
      %v1148 = vpow.pop %v1147
      %v1149 = vmul.f32 %v1120, 1.442695
      %v1150 = vpow.pop %v1149
      %v1151 = vmul.f32 %v1121, 1.442695
      %v1152 = vpow.pop %v1151
      %v1153 = vmul.f32 %v1122, 1.442695
      %v1154 = vpow.pop %v1153
      %1155 = vadd.xlane.f32.xlu0 %v1124
      %v1156 = vpop.xlane.xlu0 %1155
      %1157 = vadd.xlane.f32.xlu0 %v1126
      %v1158 = vpop.xlane.xlu0 %1157
      %1159 = vadd.xlane.f32.xlu0 %v1128
      %v1160 = vpop.xlane.xlu0 %1159
      %1161 = vadd.xlane.f32.xlu0 %v1130
      %v1162 = vpop.xlane.xlu0 %1161
      %1163 = vadd.xlane.f32.xlu0 %v1132
      %v1164 = vpop.xlane.xlu0 %1163
      %1165 = vadd.xlane.f32.xlu0 %v1134
      %v1166 = vpop.xlane.xlu0 %1165
      %1167 = vadd.xlane.f32.xlu0 %v1136
      %v1168 = vpop.xlane.xlu0 %1167
      %1169 = vadd.xlane.f32.xlu0 %v1138
      %v1170 = vpop.xlane.xlu0 %1169
      %1171 = vadd.xlane.f32.xlu0 %v1140
      %v1172 = vpop.xlane.xlu0 %1171
      %1173 = vadd.xlane.f32.xlu0 %v1142
      %v1174 = vpop.xlane.xlu0 %1173
      %1175 = vadd.xlane.f32.xlu0 %v1144
      %v1176 = vpop.xlane.xlu0 %1175
      %1177 = vadd.xlane.f32.xlu0 %v1146
      %v1178 = vpop.xlane.xlu0 %1177
      %1179 = vadd.xlane.f32.xlu0 %v1148
      %v1180 = vpop.xlane.xlu0 %1179
      %1181 = vadd.xlane.f32.xlu0 %v1150
      %v1182 = vpop.xlane.xlu0 %1181
      %1183 = vadd.xlane.f32.xlu0 %v1152
      %v1184 = vpop.xlane.xlu0 %1183
      %1185 = vadd.xlane.f32.xlu0 %v1154
      %v1186 = vpop.xlane.xlu0 %1185
      %v1187 = vrcp.pop %v1156
      %v1188 = vrcp.pop %v1158
      %v1189 = vrcp.pop %v1160
      %v1190 = vrcp.pop %v1162
      %v1191 = vrcp.pop %v1164
      %v1192 = vrcp.pop %v1166
      %v1193 = vrcp.pop %v1168
      %v1194 = vrcp.pop %v1170
      %v1195 = vrcp.pop %v1172
      %v1196 = vrcp.pop %v1174
      %v1197 = vrcp.pop %v1176
      %v1198 = vrcp.pop %v1178
      %v1199 = vrcp.pop %v1180
      %v1200 = vrcp.pop %v1182
      %v1201 = vrcp.pop %v1184
      %v1202 = vrcp.pop %v1186
      %v1203 = vmul.f32 %v1124, %v1187
      %v1204 = vmul.f32 %v1126, %v1188
      %v1205 = vmul.f32 %v1128, %v1189
      %v1206 = vmul.f32 %v1130, %v1190
      %v1207 = vmul.f32 %v1132, %v1191
      %v1208 = vmul.f32 %v1134, %v1192
      %v1209 = vmul.f32 %v1136, %v1193
      %v1210 = vmul.f32 %v1138, %v1194
      %v1211 = vmul.f32 %v1140, %v1195
      %v1212 = vmul.f32 %v1142, %v1196
      %v1213 = vmul.f32 %v1144, %v1197
      %v1214 = vmul.f32 %v1146, %v1198
      %v1215 = vmul.f32 %v1148, %v1199
      %v1216 = vmul.f32 %v1150, %v1200
      %v1217 = vmul.f32 %v1152, %v1201
      %v1218 = vmul.f32 %v1154, %v1202
      %v1219 = vpack.c.bf16 %v1204, %v1203
      %v1220 = vpack.c.bf16 %v1206, %v1205
      %v1221 = vpack.c.bf16 %v1208, %v1207
      %v1222 = vpack.c.bf16 %v1210, %v1209
      %v1223 = vpack.c.bf16 %v1212, %v1211
      %v1224 = vpack.c.bf16 %v1214, %v1213
      %v1225 = vpack.c.bf16 %v1216, %v1215
      %v1226 = vpack.c.bf16 %v1218, %v1217
      %1227 = vrot.lane.b32.xlu0 %v427, 56
      %v1228 = vpop.permute.xlu0 %1227
      %1229 = vrot.lane.b32.xlu0 %v428, 56
      %v1230 = vpop.permute.xlu0 %1229
      %1231 = vrot.lane.b32.xlu0 %v429, 56
      %v1232 = vpop.permute.xlu0 %1231
      %1233 = vrot.lane.b32.xlu0 %v430, 56
      %v1234 = vpop.permute.xlu0 %1233
      %1235 = vrot.lane.b32.xlu0 %v431, 56
      %v1236 = vpop.permute.xlu0 %1235
      %1237 = vrot.lane.b32.xlu0 %v432, 56
      %v1238 = vpop.permute.xlu0 %1237
      %1239 = vrot.lane.b32.xlu0 %v433, 56
      %v1240 = vpop.permute.xlu0 %1239
      %1241 = vrot.lane.b32.xlu0 %v434, 56
      %v1242 = vpop.permute.xlu0 %1241
      %1251 = vmatprep.subr.bf16.mxu0 0
      %1252 = vmatpush1.bf16.msra.mxu0 %v1228
      %1253 = vmatprep.subr.bf16.mxu0 0
      %1254 = vmatpush1.bf16.msra.mxu0 %v1230
      %1255 = vmatprep.subr.bf16.mxu0 0
      %1256 = vmatpush1.bf16.msra.mxu0 %v1232
      %1257 = vmatprep.subr.bf16.mxu0 0
      %1258 = vmatpush1.bf16.msra.mxu0 %v1234
      %1259 = vmatprep.subr.bf16.mxu0 0
      %1260 = vmatpush1.bf16.msra.mxu0 %v1236
      %1261 = vmatprep.subr.bf16.mxu0 0
      %1262 = vmatpush1.bf16.msra.mxu0 %v1238
      %1263 = vmatprep.subr.bf16.mxu0 0
      %1264 = vmatpush1.bf16.msra.mxu0 %v1240
      %1265 = vmatprep.subr.bf16.mxu0 0
      %1266 = vmatpush1.bf16.msra.mxu0 %v1242
      %1267 = vmatprep.subr.bf16.mxu0 0
      %1268 = vmatpush1.bf16.msra.mxu0 0
      %1269 = vmatprep.subr.bf16.mxu0 0
      %1270 = vmatpush1.bf16.msra.mxu0 0
      %1271 = vmatprep.subr.bf16.mxu0 0
      %1272 = vmatpush1.bf16.msra.mxu0 0
      %1273 = vmatprep.subr.bf16.mxu0 0
      %1274 = vmatpush1.bf16.msra.mxu0 0
      %1275 = vmatprep.subr.bf16.mxu0 0
      %1276 = vmatpush1.bf16.msra.mxu0 0
      %1277 = vmatprep.subr.bf16.mxu0 0
      %1278 = vmatpush1.bf16.msra.mxu0 0
      %1279 = vmatprep.subr.bf16.mxu0 0
      %1280 = vmatpush1.bf16.msra.mxu0 0
      %1281 = vmatprep.subr.bf16.mxu0 0
      %1282 = vmatpush1.bf16.msra.mxu0 0
      %1283 = vmatprep.mubr.bf16.mxu0 0
      %1284 = vmatmul.mubr.bf16.gmra.mrb[0].mxu0 %v1219
      %v1285 = vpop.f32.mrb[0].mxu0
      %v1286 = vadd.f32 0.0, %v1285
      %v1287 = vpop.f32.mrb[0].mxu0
      %v1288 = vpop.f32.mrb[0].mxu0
      %v1289 = vadd.f32 0.0, %v1288
      %v1290 = vpop.f32.mrb[0].mxu0
      %1291 = vmatprep.mubr.bf16.mxu0 0
      %1292 = vmatmul.mubr.bf16.gmra.mrb[0].mxu0 %v1220
      %v1293 = vpop.f32.mrb[0].mxu0
      %v1294 = vadd.f32 0.0, %v1293
      %v1295 = vpop.f32.mrb[0].mxu0
      %v1296 = vpop.f32.mrb[0].mxu0
      %v1297 = vadd.f32 0.0, %v1296
      %v1298 = vpop.f32.mrb[0].mxu0
      %1299 = vmatprep.mubr.bf16.mxu0 0
      %1300 = vmatmul.mubr.bf16.gmra.mrb[0].mxu0 %v1221
      %v1301 = vpop.f32.mrb[0].mxu0
      %v1302 = vadd.f32 0.0, %v1301
      %v1303 = vpop.f32.mrb[0].mxu0
      %v1304 = vpop.f32.mrb[0].mxu0
      %v1305 = vadd.f32 0.0, %v1304
      %v1306 = vpop.f32.mrb[0].mxu0
      %1307 = vmatprep.mubr.bf16.mxu0 0
      %1308 = vmatmul.mubr.bf16.gmra.mrb[0].mxu0 %v1222
      %v1309 = vpop.f32.mrb[0].mxu0
      %v1310 = vadd.f32 0.0, %v1309
      %v1311 = vpop.f32.mrb[0].mxu0
      %v1312 = vpop.f32.mrb[0].mxu0
      %v1313 = vadd.f32 0.0, %v1312
      %v1314 = vpop.f32.mrb[0].mxu0
      %1315 = vmatprep.mubr.bf16.mxu0 0
      %1316 = vmatmul.mubr.bf16.gmra.mrb[0].mxu0 %v1223
      %v1317 = vpop.f32.mrb[0].mxu0
      %v1318 = vadd.f32 0.0, %v1317
      %v1319 = vpop.f32.mrb[0].mxu0
      %v1320 = vpop.f32.mrb[0].mxu0
      %v1321 = vadd.f32 0.0, %v1320
      %v1322 = vpop.f32.mrb[0].mxu0
      %1323 = vmatprep.mubr.bf16.mxu0 0
      %1324 = vmatmul.mubr.bf16.gmra.mrb[0].mxu0 %v1224
      %v1325 = vpop.f32.mrb[0].mxu0
      %v1326 = vadd.f32 0.0, %v1325
      %v1327 = vpop.f32.mrb[0].mxu0
      %v1328 = vpop.f32.mrb[0].mxu0
      %v1329 = vadd.f32 0.0, %v1328
      %v1330 = vpop.f32.mrb[0].mxu0
      %1331 = vmatprep.mubr.bf16.mxu0 0
      %1332 = vmatmul.mubr.bf16.gmra.mrb[0].mxu0 %v1225
      %v1333 = vpop.f32.mrb[0].mxu0
      %v1334 = vadd.f32 0.0, %v1333
      %v1335 = vpop.f32.mrb[0].mxu0
      %v1336 = vpop.f32.mrb[0].mxu0
      %v1337 = vadd.f32 0.0, %v1336
      %v1338 = vpop.f32.mrb[0].mxu0
      %1339 = vmatprep.mubr.bf16.mxu0 0
      %1340 = vmatmul.mubr.bf16.gmra.mrb[0].mxu0 %v1226
      %v1341 = vpop.f32.mrb[0].mxu0
      %v1342 = vadd.f32 0.0, %v1341
      %v1343 = vpop.f32.mrb[0].mxu0
      %v1344 = vpop.f32.mrb[0].mxu0
      %v1345 = vadd.f32 0.0, %v1344
      %v1346 = vpop.f32.mrb[0].mxu0
      %1347 = vdwg.mxu0
      %v1348 = vpack.c.bf16 %v1289, %v1286
      %v1349 = vpack.c.bf16 %v1297, %v1294
      %v1350 = vpack.c.bf16 %v1305, %v1302
      %v1351 = vpack.c.bf16 %v1313, %v1310
      %v1352 = vpack.c.bf16 %v1321, %v1318
      %v1353 = vpack.c.bf16 %v1329, %v1326
      %v1354 = vpack.c.bf16 %v1337, %v1334
      %v1355 = vpack.c.bf16 %v1345, %v1342
      %1364 = vrot.lane.b32.xlu0 %v1348, 8
      %v1365 = vpop.permute.xlu0 %1364
      %1366 = vrot.lane.b32.xlu0 %v1349, 8
      %v1367 = vpop.permute.xlu0 %1366
      %1368 = vrot.lane.b32.xlu0 %v1350, 8
      %v1369 = vpop.permute.xlu0 %1368
      %1370 = vrot.lane.b32.xlu0 %v1351, 8
      %v1371 = vpop.permute.xlu0 %1370
      %1372 = vrot.lane.b32.xlu0 %v1352, 8
      %v1373 = vpop.permute.xlu0 %1372
      %1374 = vrot.lane.b32.xlu0 %v1353, 8
      %v1375 = vpop.permute.xlu0 %1374
      %1376 = vrot.lane.b32.xlu0 %v1354, 8
      %v1377 = vpop.permute.xlu0 %1376
      %1378 = vrot.lane.b32.xlu0 %v1355, 8
      %v1379 = vpop.permute.xlu0 %1378
      %vm1388 = vcmask 130112
      %1389 = vst.msk [vmem:[#allocation2] sm:$0xff] %vm1388, %v1365
      %1390 = vst.msk [vmem:[#allocation2 + $0x8] sm:$0xff] %vm1388, %v1367
      %1391 = vst.msk [vmem:[#allocation2 + $0x10] sm:$0xff] %vm1388, %v1369
      %1392 = vst.msk [vmem:[#allocation2 + $0x18] sm:$0xff] %vm1388, %v1371
      %1393 = vst.msk [vmem:[#allocation2 + $0x20] sm:$0xff] %vm1388, %v1373
      %1394 = vst.msk [vmem:[#allocation2 + $0x28] sm:$0xff] %vm1388, %v1375
      %1395 = vst.msk [vmem:[#allocation2 + $0x30] sm:$0xff] %vm1388, %v1377
      %1396 = vst.msk [vmem:[#allocation2 + $0x38] sm:$0xff] %vm1388, %v1379
      %1397 = vrot.lane.b32.xlu0 %v427, 112
      %v1398 = vpop.permute.xlu0 %1397
      %1399 = vrot.lane.b32.xlu0 %v428, 112
      %v1400 = vpop.permute.xlu0 %1399
      %1401 = vrot.lane.b32.xlu0 %v429, 112
      %v1402 = vpop.permute.xlu0 %1401
      %1403 = vrot.lane.b32.xlu0 %v430, 112
      %v1404 = vpop.permute.xlu0 %1403
      %1405 = vrot.lane.b32.xlu0 %v431, 112
      %v1406 = vpop.permute.xlu0 %1405
      %1407 = vrot.lane.b32.xlu0 %v432, 112
      %v1408 = vpop.permute.xlu0 %1407
      %1409 = vrot.lane.b32.xlu0 %v433, 112
      %v1410 = vpop.permute.xlu0 %1409
      %1411 = vrot.lane.b32.xlu0 %v434, 112
      %v1412 = vpop.permute.xlu0 %1411
      %1413 = vrot.lane.b32.xlu0 %v427, 80
      %v1414 = vpop.permute.xlu0 %1413
      %1415 = vrot.lane.b32.xlu0 %v428, 80
      %v1416 = vpop.permute.xlu0 %1415
      %1417 = vrot.lane.b32.xlu0 %v429, 80
      %v1418 = vpop.permute.xlu0 %1417
      %1419 = vrot.lane.b32.xlu0 %v430, 80
      %v1420 = vpop.permute.xlu0 %1419
      %1421 = vrot.lane.b32.xlu0 %v431, 80
      %v1422 = vpop.permute.xlu0 %1421
      %1423 = vrot.lane.b32.xlu0 %v432, 80
      %v1424 = vpop.permute.xlu0 %1423
      %1425 = vrot.lane.b32.xlu0 %v433, 80
      %v1426 = vpop.permute.xlu0 %1425
      %1427 = vrot.lane.b32.xlu0 %v434, 80
      %v1428 = vpop.permute.xlu0 %1427
      %v1430 = vsel %vm463, %v1398, 0
      %v1433 = vsel %vm463, %v1400, 0
      %v1436 = vsel %vm463, %v1402, 0
      %v1439 = vsel %vm463, %v1404, 0
      %v1442 = vsel %vm463, %v1406, 0
      %v1445 = vsel %vm463, %v1408, 0
      %v1448 = vsel %vm463, %v1410, 0
      %v1451 = vsel %vm463, %v1412, 0
      %v1454 = vsel %vm463, %v1414, 0
      %v1457 = vsel %vm463, %v1416, 0
      %v1460 = vsel %vm463, %v1418, 0
      %v1463 = vsel %vm463, %v1420, 0
      %v1466 = vsel %vm463, %v1422, 0
      %v1469 = vsel %vm463, %v1424, 0
      %v1472 = vsel %vm463, %v1426, 0
      %v1475 = vsel %vm463, %v1428, 0
      %1477 = vmatprep.subr.bf16.mxu0 0
      %1478 = vmatpush1.bf16.xpose.msra.mxu0 %v1454
      %1479 = vmatprep.subr.bf16.mxu0 0
      %1480 = vmatpush1.bf16.xpose.msra.mxu0 %v1457
      %1481 = vmatprep.subr.bf16.mxu0 0
      %1482 = vmatpush1.bf16.xpose.msra.mxu0 %v1460
      %1483 = vmatprep.subr.bf16.mxu0 0
      %1484 = vmatpush1.bf16.xpose.msra.mxu0 %v1463
      %1485 = vmatprep.subr.bf16.mxu0 0
      %1486 = vmatpush1.bf16.xpose.msra.mxu0 %v1466
      %1487 = vmatprep.subr.bf16.mxu0 0
      %1488 = vmatpush1.bf16.xpose.msra.mxu0 %v1469
      %1489 = vmatprep.subr.bf16.mxu0 0
      %1490 = vmatpush1.bf16.xpose.msra.mxu0 %v1472
      %1491 = vmatprep.subr.bf16.mxu0 0
      %1492 = vmatpush1.bf16.xpose.msra.mxu0 %v1475
      %1493 = vmatprep.subr.bf16.mxu0 0
      %1494 = vmatpush1.bf16.xpose.msra.mxu0 0
      %1495 = vmatprep.subr.bf16.mxu0 0
      %1496 = vmatpush1.bf16.xpose.msra.mxu0 0
      %1497 = vmatprep.subr.bf16.mxu0 0
      %1498 = vmatpush1.bf16.xpose.msra.mxu0 0
      %1499 = vmatprep.subr.bf16.mxu0 0
      %1500 = vmatpush1.bf16.xpose.msra.mxu0 0
      %1501 = vmatprep.subr.bf16.mxu0 0
      %1502 = vmatpush1.bf16.xpose.msra.mxu0 0
      %1503 = vmatprep.subr.bf16.mxu0 0
      %1504 = vmatpush1.bf16.xpose.msra.mxu0 0
      %1505 = vmatprep.subr.bf16.mxu0 0
      %1506 = vmatpush1.bf16.xpose.msra.mxu0 0
      %1507 = vmatprep.subr.bf16.mxu0 0
      %1508 = vmatpush1.bf16.xpose.msra.mxu0 0
      %1509 = vmatprep.mubr.bf16.mxu0 0
      %1510 = vmatmul.mubr.bf16.gmra.mrb[0].mxu0 %v1430
      %v1511 = vpop.f32.mrb[0].mxu0
      %v1512 = vadd.f32 %v438, %v1511
      %v1513 = vpop.f32.mrb[0].mxu0
      %v1514 = vpop.f32.mrb[0].mxu0
      %v1515 = vadd.f32 %v438, %v1514
      %v1516 = vpop.f32.mrb[0].mxu0
      %1517 = vmatprep.mubr.bf16.mxu0 0
      %1518 = vmatmul.mubr.bf16.gmra.mrb[0].mxu0 %v1433
      %v1519 = vpop.f32.mrb[0].mxu0
      %v1520 = vadd.f32 %v438, %v1519
      %v1521 = vpop.f32.mrb[0].mxu0
      %v1522 = vpop.f32.mrb[0].mxu0
      %v1523 = vadd.f32 %v438, %v1522
      %v1524 = vpop.f32.mrb[0].mxu0
      %1525 = vmatprep.mubr.bf16.mxu0 0
      %1526 = vmatmul.mubr.bf16.gmra.mrb[0].mxu0 %v1436
      %v1527 = vpop.f32.mrb[0].mxu0
      %v1528 = vadd.f32 %v438, %v1527
      %v1529 = vpop.f32.mrb[0].mxu0
      %v1530 = vpop.f32.mrb[0].mxu0
      %v1531 = vadd.f32 %v438, %v1530
      %v1532 = vpop.f32.mrb[0].mxu0
      %1533 = vmatprep.mubr.bf16.mxu0 0
      %1534 = vmatmul.mubr.bf16.gmra.mrb[0].mxu0 %v1439
      %v1535 = vpop.f32.mrb[0].mxu0
      %v1536 = vadd.f32 %v438, %v1535
      %v1537 = vpop.f32.mrb[0].mxu0
      %v1538 = vpop.f32.mrb[0].mxu0
      %v1539 = vadd.f32 %v438, %v1538
      %v1540 = vpop.f32.mrb[0].mxu0
      %1541 = vmatprep.mubr.bf16.mxu0 0
      %1542 = vmatmul.mubr.bf16.gmra.mrb[0].mxu0 %v1442
      %v1543 = vpop.f32.mrb[0].mxu0
      %v1544 = vadd.f32 %v438, %v1543
      %v1545 = vpop.f32.mrb[0].mxu0
      %v1546 = vpop.f32.mrb[0].mxu0
      %v1547 = vadd.f32 %v438, %v1546
      %v1548 = vpop.f32.mrb[0].mxu0
      %1549 = vmatprep.mubr.bf16.mxu0 0
      %1550 = vmatmul.mubr.bf16.gmra.mrb[0].mxu0 %v1445
      %v1551 = vpop.f32.mrb[0].mxu0
      %v1552 = vadd.f32 %v438, %v1551
      %v1553 = vpop.f32.mrb[0].mxu0
      %v1554 = vpop.f32.mrb[0].mxu0
      %v1555 = vadd.f32 %v438, %v1554
      %v1556 = vpop.f32.mrb[0].mxu0
      %1557 = vmatprep.mubr.bf16.mxu0 0
      %1558 = vmatmul.mubr.bf16.gmra.mrb[0].mxu0 %v1448
      %v1559 = vpop.f32.mrb[0].mxu0
      %v1560 = vadd.f32 %v438, %v1559
      %v1561 = vpop.f32.mrb[0].mxu0
      %v1562 = vpop.f32.mrb[0].mxu0
      %v1563 = vadd.f32 %v438, %v1562
      %v1564 = vpop.f32.mrb[0].mxu0
      %1565 = vmatprep.mubr.bf16.mxu0 0
      %1566 = vmatmul.mubr.bf16.gmra.mrb[0].mxu0 %v1451
      %v1567 = vpop.f32.mrb[0].mxu0
      %v1568 = vadd.f32 %v438, %v1567
      %v1569 = vpop.f32.mrb[0].mxu0
      %v1570 = vpop.f32.mrb[0].mxu0
      %v1571 = vadd.f32 %v438, %v1570
      %v1572 = vpop.f32.mrb[0].mxu0
      %1573 = vdwg.mxu0
      %1574 = vmax.xlane.f32.xlu0 %v1512
      %v1575 = vpop.xlane.xlu0 %1574
      %1576 = vmax.xlane.f32.xlu0 %v1515
      %v1577 = vpop.xlane.xlu0 %1576
      %1578 = vmax.xlane.f32.xlu0 %v1520
      %v1579 = vpop.xlane.xlu0 %1578
      %1580 = vmax.xlane.f32.xlu0 %v1523
      %v1581 = vpop.xlane.xlu0 %1580
      %1582 = vmax.xlane.f32.xlu0 %v1528
      %v1583 = vpop.xlane.xlu0 %1582
      %1584 = vmax.xlane.f32.xlu0 %v1531
      %v1585 = vpop.xlane.xlu0 %1584
      %1586 = vmax.xlane.f32.xlu0 %v1536
      %v1587 = vpop.xlane.xlu0 %1586
      %1588 = vmax.xlane.f32.xlu0 %v1539
      %v1589 = vpop.xlane.xlu0 %1588
      %1590 = vmax.xlane.f32.xlu0 %v1544
      %v1591 = vpop.xlane.xlu0 %1590
      %1592 = vmax.xlane.f32.xlu0 %v1547
      %v1593 = vpop.xlane.xlu0 %1592
      %1594 = vmax.xlane.f32.xlu0 %v1552
      %v1595 = vpop.xlane.xlu0 %1594
      %1596 = vmax.xlane.f32.xlu0 %v1555
      %v1597 = vpop.xlane.xlu0 %1596
      %1598 = vmax.xlane.f32.xlu0 %v1560
      %v1599 = vpop.xlane.xlu0 %1598
      %1600 = vmax.xlane.f32.xlu0 %v1563
      %v1601 = vpop.xlane.xlu0 %1600
      %1602 = vmax.xlane.f32.xlu0 %v1568
      %v1603 = vpop.xlane.xlu0 %1602
      %1604 = vmax.xlane.f32.xlu0 %v1571
      %v1605 = vpop.xlane.xlu0 %1604
      %v1606 = vsub.f32 %v1512, %v1575
      %v1607 = vsub.f32 %v1515, %v1577
      %v1608 = vsub.f32 %v1520, %v1579
      %v1609 = vsub.f32 %v1523, %v1581
      %v1610 = vsub.f32 %v1528, %v1583
      %v1611 = vsub.f32 %v1531, %v1585
      %v1612 = vsub.f32 %v1536, %v1587
      %v1613 = vsub.f32 %v1539, %v1589
      %v1614 = vsub.f32 %v1544, %v1591
      %v1615 = vsub.f32 %v1547, %v1593
      %v1616 = vsub.f32 %v1552, %v1595
      %v1617 = vsub.f32 %v1555, %v1597
      %v1618 = vsub.f32 %v1560, %v1599
      %v1619 = vsub.f32 %v1563, %v1601
      %v1620 = vsub.f32 %v1568, %v1603
      %v1621 = vsub.f32 %v1571, %v1605
      %v1622 = vmul.f32 %v1606, 1.442695
      %v1623 = vpow.pop %v1622
      %v1624 = vmul.f32 %v1607, 1.442695
      %v1625 = vpow.pop %v1624
      %v1626 = vmul.f32 %v1608, 1.442695
      %v1627 = vpow.pop %v1626
      %v1628 = vmul.f32 %v1609, 1.442695
      %v1629 = vpow.pop %v1628
      %v1630 = vmul.f32 %v1610, 1.442695
      %v1631 = vpow.pop %v1630
      %v1632 = vmul.f32 %v1611, 1.442695
      %v1633 = vpow.pop %v1632
      %v1634 = vmul.f32 %v1612, 1.442695
      %v1635 = vpow.pop %v1634
      %v1636 = vmul.f32 %v1613, 1.442695
      %v1637 = vpow.pop %v1636
      %v1638 = vmul.f32 %v1614, 1.442695
      %v1639 = vpow.pop %v1638
      %v1640 = vmul.f32 %v1615, 1.442695
      %v1641 = vpow.pop %v1640
      %v1642 = vmul.f32 %v1616, 1.442695
      %v1643 = vpow.pop %v1642
      %v1644 = vmul.f32 %v1617, 1.442695
      %v1645 = vpow.pop %v1644
      %v1646 = vmul.f32 %v1618, 1.442695
      %v1647 = vpow.pop %v1646
      %v1648 = vmul.f32 %v1619, 1.442695
      %v1649 = vpow.pop %v1648
      %v1650 = vmul.f32 %v1620, 1.442695
      %v1651 = vpow.pop %v1650
      %v1652 = vmul.f32 %v1621, 1.442695
      %v1653 = vpow.pop %v1652
      %1654 = vadd.xlane.f32.xlu0 %v1623
      %v1655 = vpop.xlane.xlu0 %1654
      %1656 = vadd.xlane.f32.xlu0 %v1625
      %v1657 = vpop.xlane.xlu0 %1656
      %1658 = vadd.xlane.f32.xlu0 %v1627
      %v1659 = vpop.xlane.xlu0 %1658
      %1660 = vadd.xlane.f32.xlu0 %v1629
      %v1661 = vpop.xlane.xlu0 %1660
      %1662 = vadd.xlane.f32.xlu0 %v1631
      %v1663 = vpop.xlane.xlu0 %1662
      %1664 = vadd.xlane.f32.xlu0 %v1633
      %v1665 = vpop.xlane.xlu0 %1664
      %1666 = vadd.xlane.f32.xlu0 %v1635
      %v1667 = vpop.xlane.xlu0 %1666
      %1668 = vadd.xlane.f32.xlu0 %v1637
      %v1669 = vpop.xlane.xlu0 %1668
      %1670 = vadd.xlane.f32.xlu0 %v1639
      %v1671 = vpop.xlane.xlu0 %1670
      %1672 = vadd.xlane.f32.xlu0 %v1641
      %v1673 = vpop.xlane.xlu0 %1672
      %1674 = vadd.xlane.f32.xlu0 %v1643
      %v1675 = vpop.xlane.xlu0 %1674
      %1676 = vadd.xlane.f32.xlu0 %v1645
      %v1677 = vpop.xlane.xlu0 %1676
      %1678 = vadd.xlane.f32.xlu0 %v1647
      %v1679 = vpop.xlane.xlu0 %1678
      %1680 = vadd.xlane.f32.xlu0 %v1649
      %v1681 = vpop.xlane.xlu0 %1680
      %1682 = vadd.xlane.f32.xlu0 %v1651
      %v1683 = vpop.xlane.xlu0 %1682
      %1684 = vadd.xlane.f32.xlu0 %v1653
      %v1685 = vpop.xlane.xlu0 %1684
      %v1686 = vrcp.pop %v1655
      %v1687 = vrcp.pop %v1657
      %v1688 = vrcp.pop %v1659
      %v1689 = vrcp.pop %v1661
      %v1690 = vrcp.pop %v1663
      %v1691 = vrcp.pop %v1665
      %v1692 = vrcp.pop %v1667
      %v1693 = vrcp.pop %v1669
      %v1694 = vrcp.pop %v1671
      %v1695 = vrcp.pop %v1673
      %v1696 = vrcp.pop %v1675
      %v1697 = vrcp.pop %v1677
      %v1698 = vrcp.pop %v1679
      %v1699 = vrcp.pop %v1681
      %v1700 = vrcp.pop %v1683
      %v1701 = vrcp.pop %v1685
      %v1702 = vmul.f32 %v1623, %v1686
      %v1703 = vmul.f32 %v1625, %v1687
      %v1704 = vmul.f32 %v1627, %v1688
      %v1705 = vmul.f32 %v1629, %v1689
      %v1706 = vmul.f32 %v1631, %v1690
      %v1707 = vmul.f32 %v1633, %v1691
      %v1708 = vmul.f32 %v1635, %v1692
      %v1709 = vmul.f32 %v1637, %v1693
      %v1710 = vmul.f32 %v1639, %v1694
      %v1711 = vmul.f32 %v1641, %v1695
      %v1712 = vmul.f32 %v1643, %v1696
      %v1713 = vmul.f32 %v1645, %v1697
      %v1714 = vmul.f32 %v1647, %v1698
      %v1715 = vmul.f32 %v1649, %v1699
      %v1716 = vmul.f32 %v1651, %v1700
      %v1717 = vmul.f32 %v1653, %v1701
      %v1718 = vpack.c.bf16 %v1703, %v1702
      %v1719 = vpack.c.bf16 %v1705, %v1704
      %v1720 = vpack.c.bf16 %v1707, %v1706
      %v1721 = vpack.c.bf16 %v1709, %v1708
      %v1722 = vpack.c.bf16 %v1711, %v1710
      %v1723 = vpack.c.bf16 %v1713, %v1712
      %v1724 = vpack.c.bf16 %v1715, %v1714
      %v1725 = vpack.c.bf16 %v1717, %v1716
      %1726 = vrot.lane.b32.xlu0 %v427, 48
      %v1727 = vpop.permute.xlu0 %1726
      %1728 = vrot.lane.b32.xlu0 %v428, 48
      %v1729 = vpop.permute.xlu0 %1728
      %1730 = vrot.lane.b32.xlu0 %v429, 48
      %v1731 = vpop.permute.xlu0 %1730
      %1732 = vrot.lane.b32.xlu0 %v430, 48
      %v1733 = vpop.permute.xlu0 %1732
      %1734 = vrot.lane.b32.xlu0 %v431, 48
      %v1735 = vpop.permute.xlu0 %1734
      %1736 = vrot.lane.b32.xlu0 %v432, 48
      %v1737 = vpop.permute.xlu0 %1736
      %1738 = vrot.lane.b32.xlu0 %v433, 48
      %v1739 = vpop.permute.xlu0 %1738
      %1740 = vrot.lane.b32.xlu0 %v434, 48
      %v1741 = vpop.permute.xlu0 %1740
      %1750 = vmatprep.subr.bf16.mxu0 0
      %1751 = vmatpush1.bf16.msra.mxu0 %v1727
      %1752 = vmatprep.subr.bf16.mxu0 0
      %1753 = vmatpush1.bf16.msra.mxu0 %v1729
      %1754 = vmatprep.subr.bf16.mxu0 0
      %1755 = vmatpush1.bf16.msra.mxu0 %v1731
      %1756 = vmatprep.subr.bf16.mxu0 0
      %1757 = vmatpush1.bf16.msra.mxu0 %v1733
      %1758 = vmatprep.subr.bf16.mxu0 0
      %1759 = vmatpush1.bf16.msra.mxu0 %v1735
      %1760 = vmatprep.subr.bf16.mxu0 0
      %1761 = vmatpush1.bf16.msra.mxu0 %v1737
      %1762 = vmatprep.subr.bf16.mxu0 0
      %1763 = vmatpush1.bf16.msra.mxu0 %v1739
      %1764 = vmatprep.subr.bf16.mxu0 0
      %1765 = vmatpush1.bf16.msra.mxu0 %v1741
      %1766 = vmatprep.subr.bf16.mxu0 0
      %1767 = vmatpush1.bf16.msra.mxu0 0
      %1768 = vmatprep.subr.bf16.mxu0 0
      %1769 = vmatpush1.bf16.msra.mxu0 0
      %1770 = vmatprep.subr.bf16.mxu0 0
      %1771 = vmatpush1.bf16.msra.mxu0 0
      %1772 = vmatprep.subr.bf16.mxu0 0
      %1773 = vmatpush1.bf16.msra.mxu0 0
      %1774 = vmatprep.subr.bf16.mxu0 0
      %1775 = vmatpush1.bf16.msra.mxu0 0
      %1776 = vmatprep.subr.bf16.mxu0 0
      %1777 = vmatpush1.bf16.msra.mxu0 0
      %1778 = vmatprep.subr.bf16.mxu0 0
      %1779 = vmatpush1.bf16.msra.mxu0 0
      %1780 = vmatprep.subr.bf16.mxu0 0
      %1781 = vmatpush1.bf16.msra.mxu0 0
      %1782 = vmatprep.mubr.bf16.mxu0 0
      %1783 = vmatmul.mubr.bf16.gmra.mrb[0].mxu0 %v1718
      %v1784 = vpop.f32.mrb[0].mxu0
      %v1785 = vadd.f32 0.0, %v1784
      %v1786 = vpop.f32.mrb[0].mxu0
      %v1787 = vpop.f32.mrb[0].mxu0
      %v1788 = vadd.f32 0.0, %v1787
      %v1789 = vpop.f32.mrb[0].mxu0
      %1790 = vmatprep.mubr.bf16.mxu0 0
      %1791 = vmatmul.mubr.bf16.gmra.mrb[0].mxu0 %v1719
      %v1792 = vpop.f32.mrb[0].mxu0
      %v1793 = vadd.f32 0.0, %v1792
      %v1794 = vpop.f32.mrb[0].mxu0
      %v1795 = vpop.f32.mrb[0].mxu0
      %v1796 = vadd.f32 0.0, %v1795
      %v1797 = vpop.f32.mrb[0].mxu0
      %1798 = vmatprep.mubr.bf16.mxu0 0
      %1799 = vmatmul.mubr.bf16.gmra.mrb[0].mxu0 %v1720
      %v1800 = vpop.f32.mrb[0].mxu0
      %v1801 = vadd.f32 0.0, %v1800
      %v1802 = vpop.f32.mrb[0].mxu0
      %v1803 = vpop.f32.mrb[0].mxu0
      %v1804 = vadd.f32 0.0, %v1803
      %v1805 = vpop.f32.mrb[0].mxu0
      %1806 = vmatprep.mubr.bf16.mxu0 0
      %1807 = vmatmul.mubr.bf16.gmra.mrb[0].mxu0 %v1721
      %v1808 = vpop.f32.mrb[0].mxu0
      %v1809 = vadd.f32 0.0, %v1808
      %v1810 = vpop.f32.mrb[0].mxu0
      %v1811 = vpop.f32.mrb[0].mxu0
      %v1812 = vadd.f32 0.0, %v1811
      %v1813 = vpop.f32.mrb[0].mxu0
      %1814 = vmatprep.mubr.bf16.mxu0 0
      %1815 = vmatmul.mubr.bf16.gmra.mrb[0].mxu0 %v1722
      %v1816 = vpop.f32.mrb[0].mxu0
      %v1817 = vadd.f32 0.0, %v1816
      %v1818 = vpop.f32.mrb[0].mxu0
      %v1819 = vpop.f32.mrb[0].mxu0
      %v1820 = vadd.f32 0.0, %v1819
      %v1821 = vpop.f32.mrb[0].mxu0
      %1822 = vmatprep.mubr.bf16.mxu0 0
      %1823 = vmatmul.mubr.bf16.gmra.mrb[0].mxu0 %v1723
      %v1824 = vpop.f32.mrb[0].mxu0
      %v1825 = vadd.f32 0.0, %v1824
      %v1826 = vpop.f32.mrb[0].mxu0
      %v1827 = vpop.f32.mrb[0].mxu0
      %v1828 = vadd.f32 0.0, %v1827
      %v1829 = vpop.f32.mrb[0].mxu0
      %1830 = vmatprep.mubr.bf16.mxu0 0
      %1831 = vmatmul.mubr.bf16.gmra.mrb[0].mxu0 %v1724
      %v1832 = vpop.f32.mrb[0].mxu0
      %v1833 = vadd.f32 0.0, %v1832
      %v1834 = vpop.f32.mrb[0].mxu0
      %v1835 = vpop.f32.mrb[0].mxu0
      %v1836 = vadd.f32 0.0, %v1835
      %v1837 = vpop.f32.mrb[0].mxu0
      %1838 = vmatprep.mubr.bf16.mxu0 0
      %1839 = vmatmul.mubr.bf16.gmra.mrb[0].mxu0 %v1725
      %v1840 = vpop.f32.mrb[0].mxu0
      %v1841 = vadd.f32 0.0, %v1840
      %v1842 = vpop.f32.mrb[0].mxu0
      %v1843 = vpop.f32.mrb[0].mxu0
      %v1844 = vadd.f32 0.0, %v1843
      %v1845 = vpop.f32.mrb[0].mxu0
      %1846 = vdwg.mxu0
      %v1847 = vpack.c.bf16 %v1788, %v1785
      %v1848 = vpack.c.bf16 %v1796, %v1793
      %v1849 = vpack.c.bf16 %v1804, %v1801
      %v1850 = vpack.c.bf16 %v1812, %v1809
      %v1851 = vpack.c.bf16 %v1820, %v1817
      %v1852 = vpack.c.bf16 %v1828, %v1825
      %v1853 = vpack.c.bf16 %v1836, %v1833
      %v1854 = vpack.c.bf16 %v1844, %v1841
      %1863 = vrot.lane.b32.xlu0 %v1847, 16
      %v1864 = vpop.permute.xlu0 %1863
      %1865 = vrot.lane.b32.xlu0 %v1848, 16
      %v1866 = vpop.permute.xlu0 %1865
      %1867 = vrot.lane.b32.xlu0 %v1849, 16
      %v1868 = vpop.permute.xlu0 %1867
      %1869 = vrot.lane.b32.xlu0 %v1850, 16
      %v1870 = vpop.permute.xlu0 %1869
      %1871 = vrot.lane.b32.xlu0 %v1851, 16
      %v1872 = vpop.permute.xlu0 %1871
      %1873 = vrot.lane.b32.xlu0 %v1852, 16
      %v1874 = vpop.permute.xlu0 %1873
      %1875 = vrot.lane.b32.xlu0 %v1853, 16
      %v1876 = vpop.permute.xlu0 %1875
      %1877 = vrot.lane.b32.xlu0 %v1854, 16
      %v1878 = vpop.permute.xlu0 %1877
      %vm1887 = vcmask 195712
      %1888 = vst.msk [vmem:[#allocation2] sm:$0xff] %vm1887, %v1864
      %1889 = vst.msk [vmem:[#allocation2 + $0x8] sm:$0xff] %vm1887, %v1866
      %1890 = vst.msk [vmem:[#allocation2 + $0x10] sm:$0xff] %vm1887, %v1868
      %1891 = vst.msk [vmem:[#allocation2 + $0x18] sm:$0xff] %vm1887, %v1870
      %1892 = vst.msk [vmem:[#allocation2 + $0x20] sm:$0xff] %vm1887, %v1872
      %1893 = vst.msk [vmem:[#allocation2 + $0x28] sm:$0xff] %vm1887, %v1874
      %1894 = vst.msk [vmem:[#allocation2 + $0x30] sm:$0xff] %vm1887, %v1876
      %1895 = vst.msk [vmem:[#allocation2 + $0x38] sm:$0xff] %vm1887, %v1878
      %1896 = vrot.lane.b32.xlu0 %v427, 104
      %v1897 = vpop.permute.xlu0 %1896
      %1898 = vrot.lane.b32.xlu0 %v428, 104
      %v1899 = vpop.permute.xlu0 %1898
      %1900 = vrot.lane.b32.xlu0 %v429, 104
      %v1901 = vpop.permute.xlu0 %1900
      %1902 = vrot.lane.b32.xlu0 %v430, 104
      %v1903 = vpop.permute.xlu0 %1902
      %1904 = vrot.lane.b32.xlu0 %v431, 104
      %v1905 = vpop.permute.xlu0 %1904
      %1906 = vrot.lane.b32.xlu0 %v432, 104
      %v1907 = vpop.permute.xlu0 %1906
      %1908 = vrot.lane.b32.xlu0 %v433, 104
      %v1909 = vpop.permute.xlu0 %1908
      %1910 = vrot.lane.b32.xlu0 %v434, 104
      %v1911 = vpop.permute.xlu0 %1910
      %1912 = vrot.lane.b32.xlu0 %v427, 72
      %v1913 = vpop.permute.xlu0 %1912
      %1914 = vrot.lane.b32.xlu0 %v428, 72
      %v1915 = vpop.permute.xlu0 %1914
      %1916 = vrot.lane.b32.xlu0 %v429, 72
      %v1917 = vpop.permute.xlu0 %1916
      %1918 = vrot.lane.b32.xlu0 %v430, 72
      %v1919 = vpop.permute.xlu0 %1918
      %1920 = vrot.lane.b32.xlu0 %v431, 72
      %v1921 = vpop.permute.xlu0 %1920
      %1922 = vrot.lane.b32.xlu0 %v432, 72
      %v1923 = vpop.permute.xlu0 %1922
      %1924 = vrot.lane.b32.xlu0 %v433, 72
      %v1925 = vpop.permute.xlu0 %1924
      %1926 = vrot.lane.b32.xlu0 %v434, 72
      %v1927 = vpop.permute.xlu0 %1926
      %v1929 = vsel %vm463, %v1897, 0
      %v1932 = vsel %vm463, %v1899, 0
      %v1935 = vsel %vm463, %v1901, 0
      %v1938 = vsel %vm463, %v1903, 0
      %v1941 = vsel %vm463, %v1905, 0
      %v1944 = vsel %vm463, %v1907, 0
      %v1947 = vsel %vm463, %v1909, 0
      %v1950 = vsel %vm463, %v1911, 0
      %v1953 = vsel %vm463, %v1913, 0
      %v1956 = vsel %vm463, %v1915, 0
      %v1959 = vsel %vm463, %v1917, 0
      %v1962 = vsel %vm463, %v1919, 0
      %v1965 = vsel %vm463, %v1921, 0
      %v1968 = vsel %vm463, %v1923, 0
      %v1971 = vsel %vm463, %v1925, 0
      %v1974 = vsel %vm463, %v1927, 0
      %1976 = vmatprep.subr.bf16.mxu0 0
      %1977 = vmatpush1.bf16.xpose.msra.mxu0 %v1953
      %1978 = vmatprep.subr.bf16.mxu0 0
      %1979 = vmatpush1.bf16.xpose.msra.mxu0 %v1956
      %1980 = vmatprep.subr.bf16.mxu0 0
      %1981 = vmatpush1.bf16.xpose.msra.mxu0 %v1959
      %1982 = vmatprep.subr.bf16.mxu0 0
      %1983 = vmatpush1.bf16.xpose.msra.mxu0 %v1962
      %1984 = vmatprep.subr.bf16.mxu0 0
      %1985 = vmatpush1.bf16.xpose.msra.mxu0 %v1965
      %1986 = vmatprep.subr.bf16.mxu0 0
      %1987 = vmatpush1.bf16.xpose.msra.mxu0 %v1968
      %1988 = vmatprep.subr.bf16.mxu0 0
      %1989 = vmatpush1.bf16.xpose.msra.mxu0 %v1971
      %1990 = vmatprep.subr.bf16.mxu0 0
      %1991 = vmatpush1.bf16.xpose.msra.mxu0 %v1974
      %1992 = vmatprep.subr.bf16.mxu0 0
      %1993 = vmatpush1.bf16.xpose.msra.mxu0 0
      %1994 = vmatprep.subr.bf16.mxu0 0
      %1995 = vmatpush1.bf16.xpose.msra.mxu0 0
      %1996 = vmatprep.subr.bf16.mxu0 0
      %1997 = vmatpush1.bf16.xpose.msra.mxu0 0
      %1998 = vmatprep.subr.bf16.mxu0 0
      %1999 = vmatpush1.bf16.xpose.msra.mxu0 0
      %2000 = vmatprep.subr.bf16.mxu0 0
      %2001 = vmatpush1.bf16.xpose.msra.mxu0 0
      %2002 = vmatprep.subr.bf16.mxu0 0
      %2003 = vmatpush1.bf16.xpose.msra.mxu0 0
      %2004 = vmatprep.subr.bf16.mxu0 0
      %2005 = vmatpush1.bf16.xpose.msra.mxu0 0
      %2006 = vmatprep.subr.bf16.mxu0 0
      %2007 = vmatpush1.bf16.xpose.msra.mxu0 0
      %2008 = vmatprep.mubr.bf16.mxu0 0
      %2009 = vmatmul.mubr.bf16.gmra.mrb[0].mxu0 %v1929
      %v2010 = vpop.f32.mrb[0].mxu0
      %v2011 = vadd.f32 %v438, %v2010
      %v2012 = vpop.f32.mrb[0].mxu0
      %v2013 = vpop.f32.mrb[0].mxu0
      %v2014 = vadd.f32 %v438, %v2013
      %v2015 = vpop.f32.mrb[0].mxu0
      %2016 = vmatprep.mubr.bf16.mxu0 0
      %2017 = vmatmul.mubr.bf16.gmra.mrb[0].mxu0 %v1932
      %v2018 = vpop.f32.mrb[0].mxu0
      %v2019 = vadd.f32 %v438, %v2018
      %v2020 = vpop.f32.mrb[0].mxu0
      %v2021 = vpop.f32.mrb[0].mxu0
      %v2022 = vadd.f32 %v438, %v2021
      %v2023 = vpop.f32.mrb[0].mxu0
      %2024 = vmatprep.mubr.bf16.mxu0 0
      %2025 = vmatmul.mubr.bf16.gmra.mrb[0].mxu0 %v1935
      %v2026 = vpop.f32.mrb[0].mxu0
      %v2027 = vadd.f32 %v438, %v2026
      %v2028 = vpop.f32.mrb[0].mxu0
      %v2029 = vpop.f32.mrb[0].mxu0
      %v2030 = vadd.f32 %v438, %v2029
      %v2031 = vpop.f32.mrb[0].mxu0
      %2032 = vmatprep.mubr.bf16.mxu0 0
      %2033 = vmatmul.mubr.bf16.gmra.mrb[0].mxu0 %v1938
      %v2034 = vpop.f32.mrb[0].mxu0
      %v2035 = vadd.f32 %v438, %v2034
      %v2036 = vpop.f32.mrb[0].mxu0
      %v2037 = vpop.f32.mrb[0].mxu0
      %v2038 = vadd.f32 %v438, %v2037
      %v2039 = vpop.f32.mrb[0].mxu0
      %2040 = vmatprep.mubr.bf16.mxu0 0
      %2041 = vmatmul.mubr.bf16.gmra.mrb[0].mxu0 %v1941
      %v2042 = vpop.f32.mrb[0].mxu0
      %v2043 = vadd.f32 %v438, %v2042
      %v2044 = vpop.f32.mrb[0].mxu0
      %v2045 = vpop.f32.mrb[0].mxu0
      %v2046 = vadd.f32 %v438, %v2045
      %v2047 = vpop.f32.mrb[0].mxu0
      %2048 = vmatprep.mubr.bf16.mxu0 0
      %2049 = vmatmul.mubr.bf16.gmra.mrb[0].mxu0 %v1944
      %v2050 = vpop.f32.mrb[0].mxu0
      %v2051 = vadd.f32 %v438, %v2050
      %v2052 = vpop.f32.mrb[0].mxu0
      %v2053 = vpop.f32.mrb[0].mxu0
      %v2054 = vadd.f32 %v438, %v2053
      %v2055 = vpop.f32.mrb[0].mxu0
      %2056 = vmatprep.mubr.bf16.mxu0 0
      %2057 = vmatmul.mubr.bf16.gmra.mrb[0].mxu0 %v1947
      %v2058 = vpop.f32.mrb[0].mxu0
      %v2059 = vadd.f32 %v438, %v2058
      %v2060 = vpop.f32.mrb[0].mxu0
      %v2061 = vpop.f32.mrb[0].mxu0
      %v2062 = vadd.f32 %v438, %v2061
      %v2063 = vpop.f32.mrb[0].mxu0
      %2064 = vmatprep.mubr.bf16.mxu0 0
      %2065 = vmatmul.mubr.bf16.gmra.mrb[0].mxu0 %v1950
      %v2066 = vpop.f32.mrb[0].mxu0
      %v2067 = vadd.f32 %v438, %v2066
      %v2068 = vpop.f32.mrb[0].mxu0
      %v2069 = vpop.f32.mrb[0].mxu0
      %v2070 = vadd.f32 %v438, %v2069
      %v2071 = vpop.f32.mrb[0].mxu0
      %2072 = vdwg.mxu0
      %2073 = vmax.xlane.f32.xlu0 %v2011
      %v2074 = vpop.xlane.xlu0 %2073
      %2075 = vmax.xlane.f32.xlu0 %v2014
      %v2076 = vpop.xlane.xlu0 %2075
      %2077 = vmax.xlane.f32.xlu0 %v2019
      %v2078 = vpop.xlane.xlu0 %2077
      %2079 = vmax.xlane.f32.xlu0 %v2022
      %v2080 = vpop.xlane.xlu0 %2079
      %2081 = vmax.xlane.f32.xlu0 %v2027
      %v2082 = vpop.xlane.xlu0 %2081
      %2083 = vmax.xlane.f32.xlu0 %v2030
      %v2084 = vpop.xlane.xlu0 %2083
      %2085 = vmax.xlane.f32.xlu0 %v2035
      %v2086 = vpop.xlane.xlu0 %2085
      %2087 = vmax.xlane.f32.xlu0 %v2038
      %v2088 = vpop.xlane.xlu0 %2087
      %2089 = vmax.xlane.f32.xlu0 %v2043
      %v2090 = vpop.xlane.xlu0 %2089
      %2091 = vmax.xlane.f32.xlu0 %v2046
      %v2092 = vpop.xlane.xlu0 %2091
      %2093 = vmax.xlane.f32.xlu0 %v2051
      %v2094 = vpop.xlane.xlu0 %2093
      %2095 = vmax.xlane.f32.xlu0 %v2054
      %v2096 = vpop.xlane.xlu0 %2095
      %2097 = vmax.xlane.f32.xlu0 %v2059
      %v2098 = vpop.xlane.xlu0 %2097
      %2099 = vmax.xlane.f32.xlu0 %v2062
      %v2100 = vpop.xlane.xlu0 %2099
      %2101 = vmax.xlane.f32.xlu0 %v2067
      %v2102 = vpop.xlane.xlu0 %2101
      %2103 = vmax.xlane.f32.xlu0 %v2070
      %v2104 = vpop.xlane.xlu0 %2103
      %v2105 = vsub.f32 %v2011, %v2074
      %v2106 = vsub.f32 %v2014, %v2076
      %v2107 = vsub.f32 %v2019, %v2078
      %v2108 = vsub.f32 %v2022, %v2080
      %v2109 = vsub.f32 %v2027, %v2082
      %v2110 = vsub.f32 %v2030, %v2084
      %v2111 = vsub.f32 %v2035, %v2086
      %v2112 = vsub.f32 %v2038, %v2088
      %v2113 = vsub.f32 %v2043, %v2090
      %v2114 = vsub.f32 %v2046, %v2092
      %v2115 = vsub.f32 %v2051, %v2094
      %v2116 = vsub.f32 %v2054, %v2096
      %v2117 = vsub.f32 %v2059, %v2098
      %v2118 = vsub.f32 %v2062, %v2100
      %v2119 = vsub.f32 %v2067, %v2102
      %v2120 = vsub.f32 %v2070, %v2104
      %v2121 = vmul.f32 %v2105, 1.442695
      %v2122 = vpow.pop %v2121
      %v2123 = vmul.f32 %v2106, 1.442695
      %v2124 = vpow.pop %v2123
      %v2125 = vmul.f32 %v2107, 1.442695
      %v2126 = vpow.pop %v2125
      %v2127 = vmul.f32 %v2108, 1.442695
      %v2128 = vpow.pop %v2127
      %v2129 = vmul.f32 %v2109, 1.442695
      %v2130 = vpow.pop %v2129
      %v2131 = vmul.f32 %v2110, 1.442695
      %v2132 = vpow.pop %v2131
      %v2133 = vmul.f32 %v2111, 1.442695
      %v2134 = vpow.pop %v2133
      %v2135 = vmul.f32 %v2112, 1.442695
      %v2136 = vpow.pop %v2135
      %v2137 = vmul.f32 %v2113, 1.442695
      %v2138 = vpow.pop %v2137
      %v2139 = vmul.f32 %v2114, 1.442695
      %v2140 = vpow.pop %v2139
      %v2141 = vmul.f32 %v2115, 1.442695
      %v2142 = vpow.pop %v2141
      %v2143 = vmul.f32 %v2116, 1.442695
      %v2144 = vpow.pop %v2143
      %v2145 = vmul.f32 %v2117, 1.442695
      %v2146 = vpow.pop %v2145
      %v2147 = vmul.f32 %v2118, 1.442695
      %v2148 = vpow.pop %v2147
      %v2149 = vmul.f32 %v2119, 1.442695
      %v2150 = vpow.pop %v2149
      %v2151 = vmul.f32 %v2120, 1.442695
      %v2152 = vpow.pop %v2151
      %2153 = vadd.xlane.f32.xlu0 %v2122
      %v2154 = vpop.xlane.xlu0 %2153
      %2155 = vadd.xlane.f32.xlu0 %v2124
      %v2156 = vpop.xlane.xlu0 %2155
      %2157 = vadd.xlane.f32.xlu0 %v2126
      %v2158 = vpop.xlane.xlu0 %2157
      %2159 = vadd.xlane.f32.xlu0 %v2128
      %v2160 = vpop.xlane.xlu0 %2159
      %2161 = vadd.xlane.f32.xlu0 %v2130
      %v2162 = vpop.xlane.xlu0 %2161
      %2163 = vadd.xlane.f32.xlu0 %v2132
      %v2164 = vpop.xlane.xlu0 %2163
      %2165 = vadd.xlane.f32.xlu0 %v2134
      %v2166 = vpop.xlane.xlu0 %2165
      %2167 = vadd.xlane.f32.xlu0 %v2136
      %v2168 = vpop.xlane.xlu0 %2167
      %2169 = vadd.xlane.f32.xlu0 %v2138
      %v2170 = vpop.xlane.xlu0 %2169
      %2171 = vadd.xlane.f32.xlu0 %v2140
      %v2172 = vpop.xlane.xlu0 %2171
      %2173 = vadd.xlane.f32.xlu0 %v2142
      %v2174 = vpop.xlane.xlu0 %2173
      %2175 = vadd.xlane.f32.xlu0 %v2144
      %v2176 = vpop.xlane.xlu0 %2175
      %2177 = vadd.xlane.f32.xlu0 %v2146
      %v2178 = vpop.xlane.xlu0 %2177
      %2179 = vadd.xlane.f32.xlu0 %v2148
      %v2180 = vpop.xlane.xlu0 %2179
      %2181 = vadd.xlane.f32.xlu0 %v2150
      %v2182 = vpop.xlane.xlu0 %2181
      %2183 = vadd.xlane.f32.xlu0 %v2152
      %v2184 = vpop.xlane.xlu0 %2183
      %v2185 = vrcp.pop %v2154
      %v2186 = vrcp.pop %v2156
      %v2187 = vrcp.pop %v2158
      %v2188 = vrcp.pop %v2160
      %v2189 = vrcp.pop %v2162
      %v2190 = vrcp.pop %v2164
      %v2191 = vrcp.pop %v2166
      %v2192 = vrcp.pop %v2168
      %v2193 = vrcp.pop %v2170
      %v2194 = vrcp.pop %v2172
      %v2195 = vrcp.pop %v2174
      %v2196 = vrcp.pop %v2176
      %v2197 = vrcp.pop %v2178
      %v2198 = vrcp.pop %v2180
      %v2199 = vrcp.pop %v2182
      %v2200 = vrcp.pop %v2184
      %v2201 = vmul.f32 %v2122, %v2185
      %v2202 = vmul.f32 %v2124, %v2186
      %v2203 = vmul.f32 %v2126, %v2187
      %v2204 = vmul.f32 %v2128, %v2188
      %v2205 = vmul.f32 %v2130, %v2189
      %v2206 = vmul.f32 %v2132, %v2190
      %v2207 = vmul.f32 %v2134, %v2191
      %v2208 = vmul.f32 %v2136, %v2192
      %v2209 = vmul.f32 %v2138, %v2193
      %v2210 = vmul.f32 %v2140, %v2194
      %v2211 = vmul.f32 %v2142, %v2195
      %v2212 = vmul.f32 %v2144, %v2196
      %v2213 = vmul.f32 %v2146, %v2197
      %v2214 = vmul.f32 %v2148, %v2198
      %v2215 = vmul.f32 %v2150, %v2199
      %v2216 = vmul.f32 %v2152, %v2200
      %v2217 = vpack.c.bf16 %v2202, %v2201
      %v2218 = vpack.c.bf16 %v2204, %v2203
      %v2219 = vpack.c.bf16 %v2206, %v2205
      %v2220 = vpack.c.bf16 %v2208, %v2207
      %v2221 = vpack.c.bf16 %v2210, %v2209
      %v2222 = vpack.c.bf16 %v2212, %v2211
      %v2223 = vpack.c.bf16 %v2214, %v2213
      %v2224 = vpack.c.bf16 %v2216, %v2215
      %2225 = vrot.lane.b32.xlu0 %v427, 40
      %v2226 = vpop.permute.xlu0 %2225
      %2227 = vrot.lane.b32.xlu0 %v428, 40
      %v2228 = vpop.permute.xlu0 %2227
      %2229 = vrot.lane.b32.xlu0 %v429, 40
      %v2230 = vpop.permute.xlu0 %2229
      %2231 = vrot.lane.b32.xlu0 %v430, 40
      %v2232 = vpop.permute.xlu0 %2231
      %2233 = vrot.lane.b32.xlu0 %v431, 40
      %v2234 = vpop.permute.xlu0 %2233
      %2235 = vrot.lane.b32.xlu0 %v432, 40
      %v2236 = vpop.permute.xlu0 %2235
      %2237 = vrot.lane.b32.xlu0 %v433, 40
      %v2238 = vpop.permute.xlu0 %2237
      %2239 = vrot.lane.b32.xlu0 %v434, 40
      %v2240 = vpop.permute.xlu0 %2239
      %2249 = vmatprep.subr.bf16.mxu0 0
      %2250 = vmatpush1.bf16.msra.mxu0 %v2226
      %2251 = vmatprep.subr.bf16.mxu0 0
      %2252 = vmatpush1.bf16.msra.mxu0 %v2228
      %2253 = vmatprep.subr.bf16.mxu0 0
      %2254 = vmatpush1.bf16.msra.mxu0 %v2230
      %2255 = vmatprep.subr.bf16.mxu0 0
      %2256 = vmatpush1.bf16.msra.mxu0 %v2232
      %2257 = vmatprep.subr.bf16.mxu0 0
      %2258 = vmatpush1.bf16.msra.mxu0 %v2234
      %2259 = vmatprep.subr.bf16.mxu0 0
      %2260 = vmatpush1.bf16.msra.mxu0 %v2236
      %2261 = vmatprep.subr.bf16.mxu0 0
      %2262 = vmatpush1.bf16.msra.mxu0 %v2238
      %2263 = vmatprep.subr.bf16.mxu0 0
      %2264 = vmatpush1.bf16.msra.mxu0 %v2240
      %2265 = vmatprep.subr.bf16.mxu0 0
      %2266 = vmatpush1.bf16.msra.mxu0 0
      %2267 = vmatprep.subr.bf16.mxu0 0
      %2268 = vmatpush1.bf16.msra.mxu0 0
      %2269 = vmatprep.subr.bf16.mxu0 0
      %2270 = vmatpush1.bf16.msra.mxu0 0
      %2271 = vmatprep.subr.bf16.mxu0 0
      %2272 = vmatpush1.bf16.msra.mxu0 0
      %2273 = vmatprep.subr.bf16.mxu0 0
      %2274 = vmatpush1.bf16.msra.mxu0 0
      %2275 = vmatprep.subr.bf16.mxu0 0
      %2276 = vmatpush1.bf16.msra.mxu0 0
      %2277 = vmatprep.subr.bf16.mxu0 0
      %2278 = vmatpush1.bf16.msra.mxu0 0
      %2279 = vmatprep.subr.bf16.mxu0 0
      %2280 = vmatpush1.bf16.msra.mxu0 0
      %2281 = vmatprep.mubr.bf16.mxu0 0
      %2282 = vmatmul.mubr.bf16.gmra.mrb[0].mxu0 %v2217
      %v2283 = vpop.f32.mrb[0].mxu0
      %v2284 = vadd.f32 0.0, %v2283
      %v2285 = vpop.f32.mrb[0].mxu0
      %v2286 = vpop.f32.mrb[0].mxu0
      %v2287 = vadd.f32 0.0, %v2286
      %v2288 = vpop.f32.mrb[0].mxu0
      %2289 = vmatprep.mubr.bf16.mxu0 0
      %2290 = vmatmul.mubr.bf16.gmra.mrb[0].mxu0 %v2218
      %v2291 = vpop.f32.mrb[0].mxu0
      %v2292 = vadd.f32 0.0, %v2291
      %v2293 = vpop.f32.mrb[0].mxu0
      %v2294 = vpop.f32.mrb[0].mxu0
      %v2295 = vadd.f32 0.0, %v2294
      %v2296 = vpop.f32.mrb[0].mxu0
      %2297 = vmatprep.mubr.bf16.mxu0 0
      %2298 = vmatmul.mubr.bf16.gmra.mrb[0].mxu0 %v2219
      %v2299 = vpop.f32.mrb[0].mxu0
      %v2300 = vadd.f32 0.0, %v2299
      %v2301 = vpop.f32.mrb[0].mxu0
      %v2302 = vpop.f32.mrb[0].mxu0
      %v2303 = vadd.f32 0.0, %v2302
      %v2304 = vpop.f32.mrb[0].mxu0
      %2305 = vmatprep.mubr.bf16.mxu0 0
      %2306 = vmatmul.mubr.bf16.gmra.mrb[0].mxu0 %v2220
      %v2307 = vpop.f32.mrb[0].mxu0
      %v2308 = vadd.f32 0.0, %v2307
      %v2309 = vpop.f32.mrb[0].mxu0
      %v2310 = vpop.f32.mrb[0].mxu0
      %v2311 = vadd.f32 0.0, %v2310
      %v2312 = vpop.f32.mrb[0].mxu0
      %2313 = vmatprep.mubr.bf16.mxu0 0
      %2314 = vmatmul.mubr.bf16.gmra.mrb[0].mxu0 %v2221
      %v2315 = vpop.f32.mrb[0].mxu0
      %v2316 = vadd.f32 0.0, %v2315
      %v2317 = vpop.f32.mrb[0].mxu0
      %v2318 = vpop.f32.mrb[0].mxu0
      %v2319 = vadd.f32 0.0, %v2318
      %v2320 = vpop.f32.mrb[0].mxu0
      %2321 = vmatprep.mubr.bf16.mxu0 0
      %2322 = vmatmul.mubr.bf16.gmra.mrb[0].mxu0 %v2222
      %v2323 = vpop.f32.mrb[0].mxu0
      %v2324 = vadd.f32 0.0, %v2323
      %v2325 = vpop.f32.mrb[0].mxu0
      %v2326 = vpop.f32.mrb[0].mxu0
      %v2327 = vadd.f32 0.0, %v2326
      %v2328 = vpop.f32.mrb[0].mxu0
      %2329 = vmatprep.mubr.bf16.mxu0 0
      %2330 = vmatmul.mubr.bf16.gmra.mrb[0].mxu0 %v2223
      %v2331 = vpop.f32.mrb[0].mxu0
      %v2332 = vadd.f32 0.0, %v2331
      %v2333 = vpop.f32.mrb[0].mxu0
      %v2334 = vpop.f32.mrb[0].mxu0
      %v2335 = vadd.f32 0.0, %v2334
      %v2336 = vpop.f32.mrb[0].mxu0
      %2337 = vmatprep.mubr.bf16.mxu0 0
      %2338 = vmatmul.mubr.bf16.gmra.mrb[0].mxu0 %v2224
      %v2339 = vpop.f32.mrb[0].mxu0
      %v2340 = vadd.f32 0.0, %v2339
      %v2341 = vpop.f32.mrb[0].mxu0
      %v2342 = vpop.f32.mrb[0].mxu0
      %v2343 = vadd.f32 0.0, %v2342
      %v2344 = vpop.f32.mrb[0].mxu0
      %2345 = vdwg.mxu0
      %v2346 = vpack.c.bf16 %v2287, %v2284
      %v2347 = vpack.c.bf16 %v2295, %v2292
      %v2348 = vpack.c.bf16 %v2303, %v2300
      %v2349 = vpack.c.bf16 %v2311, %v2308
      %v2350 = vpack.c.bf16 %v2319, %v2316
      %v2351 = vpack.c.bf16 %v2327, %v2324
      %v2352 = vpack.c.bf16 %v2335, %v2332
      %v2353 = vpack.c.bf16 %v2343, %v2340
      %2362 = vrot.lane.b32.xlu0 %v2346, 24
      %v2363 = vpop.permute.xlu0 %2362
      %2364 = vrot.lane.b32.xlu0 %v2347, 24
      %v2365 = vpop.permute.xlu0 %2364
      %2366 = vrot.lane.b32.xlu0 %v2348, 24
      %v2367 = vpop.permute.xlu0 %2366
      %2368 = vrot.lane.b32.xlu0 %v2349, 24
      %v2369 = vpop.permute.xlu0 %2368
      %2370 = vrot.lane.b32.xlu0 %v2350, 24
      %v2371 = vpop.permute.xlu0 %2370
      %2372 = vrot.lane.b32.xlu0 %v2351, 24
      %v2373 = vpop.permute.xlu0 %2372
      %2374 = vrot.lane.b32.xlu0 %v2352, 24
      %v2375 = vpop.permute.xlu0 %2374
      %2376 = vrot.lane.b32.xlu0 %v2353, 24
      %v2377 = vpop.permute.xlu0 %2376
      %vm2386 = vcmask 261312
      %2387 = vst.msk [vmem:[#allocation2] sm:$0xff] %vm2386, %v2363
      %2388 = vst.msk [vmem:[#allocation2 + $0x8] sm:$0xff] %vm2386, %v2365
      %2389 = vst.msk [vmem:[#allocation2 + $0x10] sm:$0xff] %vm2386, %v2367
      %2390 = vst.msk [vmem:[#allocation2 + $0x18] sm:$0xff] %vm2386, %v2369
      %2391 = vst.msk [vmem:[#allocation2 + $0x20] sm:$0xff] %vm2386, %v2371
      %2392 = vst.msk [vmem:[#allocation2 + $0x28] sm:$0xff] %vm2386, %v2373
      %2393 = vst.msk [vmem:[#allocation2 + $0x30] sm:$0xff] %vm2386, %v2375
      %2394 = vst.msk [vmem:[#allocation2 + $0x38] sm:$0xff] %vm2386, %v2377
      %v2395 = vld [vmem:[#allocation2] sm:$0xff]
      %v2396 = vld [vmem:[#allocation2 + $0x8] sm:$0xff]
      %v2397 = vld [vmem:[#allocation2 + $0x10] sm:$0xff]
      %v2398 = vld [vmem:[#allocation2 + $0x18] sm:$0xff]
      %v2399 = vld [vmem:[#allocation2 + $0x20] sm:$0xff]
      %v2400 = vld [vmem:[#allocation2 + $0x28] sm:$0xff]
      %v2401 = vld [vmem:[#allocation2 + $0x30] sm:$0xff]
      %v2402 = vld [vmem:[#allocation2 + $0x38] sm:$0xff]
      %v2403 = vld [vmem:[%s3] sm:$0xf]
      %v2404 = vld [vmem:[%s3 + $0x4] sm:$0xf]
      %v2405 = vld [vmem:[%s3 + $0x8] sm:$0xf]
      %v2406 = vld [vmem:[%s3 + $0xc] sm:$0xf]
      %v2407 = vld [vmem:[%s4] sm:$0x1]
      %v2409 = vlaneseq
      %v2410 = vshrl.u32 %v2409, 7
      %v2411 = vsub.s32 0, %v2410
      %v2412 = vrot.slane %v2407, %v2411
      %v2418 = vunpack.c.l.b16 %v2403
      %v2419 = vunpack.c.l.b16 %v2404
      %v2420 = vunpack.c.l.b16 %v2405
      %v2421 = vunpack.c.l.b16 %v2406
      %v2422 = vpack.c.b16 %v2419, %v2418
      %v2423 = vpack.c.b16 %v2421, %v2420
      %v2427 = vsel %vm305, %v2395, 0
      %v2430 = vsel %vm305, %v2396, 0
      %v2433 = vsel %vm305, %v2397, 0
      %v2436 = vsel %vm305, %v2398, 0
      %v2439 = vsel %vm305, %v2399, 0
      %v2442 = vsel %vm305, %v2400, 0
      %v2445 = vsel %vm305, %v2401, 0
      %v2448 = vsel %vm305, %v2402, 0
      %2450 = vmatprep.subr.bf16.mxu0 0
      %2451 = vmatpush1.bf16.msra.mxu0 %v2422
      %2452 = vmatprep.subr.bf16.mxu0 0
      %2453 = vmatpush1.bf16.msra.mxu0 %v2423
      %2454 = vmatprep.subr.bf16.mxu0 0
      %2455 = vmatpush1.bf16.msra.mxu0 0
      %2456 = vmatprep.subr.bf16.mxu0 0
      %2457 = vmatpush1.bf16.msra.mxu0 0
      %2458 = vmatprep.subr.bf16.mxu0 0
      %2459 = vmatpush1.bf16.msra.mxu0 0
      %2460 = vmatprep.subr.bf16.mxu0 0
      %2461 = vmatpush1.bf16.msra.mxu0 0
      %2462 = vmatprep.subr.bf16.mxu0 0
      %2463 = vmatpush1.bf16.msra.mxu0 0
      %2464 = vmatprep.subr.bf16.mxu0 0
      %2465 = vmatpush1.bf16.msra.mxu0 0
      %2466 = vmatprep.subr.bf16.mxu0 0
      %2467 = vmatpush1.bf16.msra.mxu0 0
      %2468 = vmatprep.subr.bf16.mxu0 0
      %2469 = vmatpush1.bf16.msra.mxu0 0
      %2470 = vmatprep.subr.bf16.mxu0 0
      %2471 = vmatpush1.bf16.msra.mxu0 0
      %2472 = vmatprep.subr.bf16.mxu0 0
      %2473 = vmatpush1.bf16.msra.mxu0 0
      %2474 = vmatprep.subr.bf16.mxu0 0
      %2475 = vmatpush1.bf16.msra.mxu0 0
      %2476 = vmatprep.subr.bf16.mxu0 0
      %2477 = vmatpush1.bf16.msra.mxu0 0
      %2478 = vmatprep.subr.bf16.mxu0 0
      %2479 = vmatpush1.bf16.msra.mxu0 0
      %2480 = vmatprep.subr.bf16.mxu0 0
      %2481 = vmatpush1.bf16.msra.mxu0 0
      %2482 = vmatprep.mubr.bf16.mxu0 0
      %2483 = vmatmul.mubr.bf16.gmra.mrb[0].mxu0 %v2427
      %v2484 = vpop.f32.mrb[0].mxu0
      %v2485 = vadd.f32 %v2412, %v2484
      %v2486 = vpop.f32.mrb[0].mxu0
      %v2487 = vpop.f32.mrb[0].mxu0
      %v2488 = vadd.f32 %v2412, %v2487
      %v2489 = vpop.f32.mrb[0].mxu0
      %2490 = vmatprep.mubr.bf16.mxu0 0
      %2491 = vmatmul.mubr.bf16.gmra.mrb[0].mxu0 %v2430
      %v2492 = vpop.f32.mrb[0].mxu0
      %v2493 = vadd.f32 %v2412, %v2492
      %v2494 = vpop.f32.mrb[0].mxu0
      %v2495 = vpop.f32.mrb[0].mxu0
      %v2496 = vadd.f32 %v2412, %v2495
      %v2497 = vpop.f32.mrb[0].mxu0
      %2498 = vmatprep.mubr.bf16.mxu0 0
      %2499 = vmatmul.mubr.bf16.gmra.mrb[0].mxu0 %v2433
      %v2500 = vpop.f32.mrb[0].mxu0
      %v2501 = vadd.f32 %v2412, %v2500
      %v2502 = vpop.f32.mrb[0].mxu0
      %v2503 = vpop.f32.mrb[0].mxu0
      %v2504 = vadd.f32 %v2412, %v2503
      %v2505 = vpop.f32.mrb[0].mxu0
      %2506 = vmatprep.mubr.bf16.mxu0 0
      %2507 = vmatmul.mubr.bf16.gmra.mrb[0].mxu0 %v2436
      %v2508 = vpop.f32.mrb[0].mxu0
      %v2509 = vadd.f32 %v2412, %v2508
      %v2510 = vpop.f32.mrb[0].mxu0
      %v2511 = vpop.f32.mrb[0].mxu0
      %v2512 = vadd.f32 %v2412, %v2511
      %v2513 = vpop.f32.mrb[0].mxu0
      %2514 = vmatprep.mubr.bf16.mxu0 0
      %2515 = vmatmul.mubr.bf16.gmra.mrb[0].mxu0 %v2439
      %v2516 = vpop.f32.mrb[0].mxu0
      %v2517 = vadd.f32 %v2412, %v2516
      %v2518 = vpop.f32.mrb[0].mxu0
      %v2519 = vpop.f32.mrb[0].mxu0
      %v2520 = vadd.f32 %v2412, %v2519
      %v2521 = vpop.f32.mrb[0].mxu0
      %2522 = vmatprep.mubr.bf16.mxu0 0
      %2523 = vmatmul.mubr.bf16.gmra.mrb[0].mxu0 %v2442
      %v2524 = vpop.f32.mrb[0].mxu0
      %v2525 = vadd.f32 %v2412, %v2524
      %v2526 = vpop.f32.mrb[0].mxu0
      %v2527 = vpop.f32.mrb[0].mxu0
      %v2528 = vadd.f32 %v2412, %v2527
      %v2529 = vpop.f32.mrb[0].mxu0
      %2530 = vmatprep.mubr.bf16.mxu0 0
      %2531 = vmatmul.mubr.bf16.gmra.mrb[0].mxu0 %v2445
      %v2532 = vpop.f32.mrb[0].mxu0
      %v2533 = vadd.f32 %v2412, %v2532
      %v2534 = vpop.f32.mrb[0].mxu0
      %v2535 = vpop.f32.mrb[0].mxu0
      %v2536 = vadd.f32 %v2412, %v2535
      %v2537 = vpop.f32.mrb[0].mxu0
      %2538 = vmatprep.mubr.bf16.mxu0 0
      %2539 = vmatmul.mubr.bf16.gmra.mrb[0].mxu0 %v2448
      %v2540 = vpop.f32.mrb[0].mxu0
      %v2541 = vadd.f32 %v2412, %v2540
      %v2542 = vpop.f32.mrb[0].mxu0
      %v2543 = vpop.f32.mrb[0].mxu0
      %v2544 = vadd.f32 %v2412, %v2543
      %v2545 = vpop.f32.mrb[0].mxu0
      %2546 = vdwg.mxu0
      %2547 = vst.msk [vmem:[%s224] sm:$0xff] %vm305, %v2485
      %2548 = vst.msk [vmem:[%s224 + $0x8] sm:$0xff] %vm305, %v2488
      %2549 = vst.msk [vmem:[%s224 + $0x10] sm:$0xff] %vm305, %v2493
      %2550 = vst.msk [vmem:[%s224 + $0x18] sm:$0xff] %vm305, %v2496
      %2551 = vst.msk [vmem:[%s224 + $0x20] sm:$0xff] %vm305, %v2501
      %2552 = vst.msk [vmem:[%s224 + $0x28] sm:$0xff] %vm305, %v2504
      %2553 = vst.msk [vmem:[%s224 + $0x30] sm:$0xff] %vm305, %v2509
      %2554 = vst.msk [vmem:[%s224 + $0x38] sm:$0xff] %vm305, %v2512
      %2555 = vst.msk [vmem:[%s224 + $0x40] sm:$0xff] %vm305, %v2517
      %2556 = vst.msk [vmem:[%s224 + $0x48] sm:$0xff] %vm305, %v2520
      %2557 = vst.msk [vmem:[%s224 + $0x50] sm:$0xff] %vm305, %v2525
      %2558 = vst.msk [vmem:[%s224 + $0x58] sm:$0xff] %vm305, %v2528
      %2559 = vst.msk [vmem:[%s224 + $0x60] sm:$0xff] %vm305, %v2533
      %2560 = vst.msk [vmem:[%s224 + $0x68] sm:$0xff] %vm305, %v2536
      %2561 = vst.msk [vmem:[%s224 + $0x70] sm:$0xff] %vm305, %v2541
      %2562 = vst.msk [vmem:[%s224 + $0x78] sm:$0xff] %vm305, %v2544
      %p2563 = scmp.lt.s32.totalorder %s16, 1
      %s2564 = scalar_select %p2563, %s16, 1
      %s2565 = smul.addr %s2564, 16
      %s2566 = smul.addr %s2565, 8
      %s2567 = scalar_lea.vmem %s5, %s2566
      // Predicated region
      $region41: #{multi_headed_attention.1} parent=39 // pred_check
        %p2568 = pneg %p144
      $region42: #{multi_headed_attention.1} parent=39 // pred_check_branch
        %2570 = sbr.rel (%p2568) target = $region44
      $region43: #{multi_headed_attention.1} parent=39 // pred_region
        _
      $region44: #{multi_headed_attention.1} parent=39 // pred_fallthru
        _
    $region40: #{multi_headed_attention.1} parent=5 // pred_fallthru
      _
    %p2571 = scmp.le.s32.totalorder 2, %s11
    // Predicated region
    $region45: #{multi_headed_attention.1} parent=5 // pred_check
      %p2572 = pneg %p2571
    $region46: #{multi_headed_attention.1} parent=5 // pred_check_branch
      %2574 = sbr.rel (%p2572) target = $region48
    $region47: #{multi_headed_attention.1} parent=5 // pred_region
      %s2575 = ssub.s32 %s11, 2
      // Predicated region
      $region49: #{multi_headed_attention.1} parent=47 // pred_check
        %p2576 = pneg %p150
      $region50: #{multi_headed_attention.1} parent=47 // pred_check_branch
        %2578 = sbr.rel (%p2576) target = $region52
      $region51: #{multi_headed_attention.1} parent=47 // pred_region
        %p2579 = scmp.lt.s32.totalorder %s17, 1
        %s2580 = scalar_select %p2579, %s17, 1
        %s2581 = smul.addr %s2580, 16
        %s2582 = smul.addr %s2581, 8
        %s2583 = scalar_lea.vmem %s5, %s2582
      $region52: #{multi_headed_attention.1} parent=47 // pred_fallthru
        _
    $region48: #{multi_headed_attention.1} parent=5 // pred_fallthru
      _
  $region6: #{multi_headed_attention.1} parent=0 // loop_footer
    %s15 = sadd.s32 1, %s11
  $region7: #{multi_headed_attention.1} parent=0 // loop_footer_branch
    %10 = sbr.rel target = $region3
  $region8: #{multi_headed_attention.1} parent=0 // loop_exit
    _

</llo_original>
